<compile_context>
chip_gen: v5e
topology: v5e:2x2
jax: 0.10.0
libtpu: 0.0.40
codegen_flags: <defaults>
</compile_context>

<pallas_src>
from functools import partial

import numpy as np
import jax
import jax.numpy as jnp
from jax import lax
from jax.experimental import pallas as pl
from jax.experimental.pallas import tpu as pltpu


GATE_LANES = 128  # one full vreg lane-slot per gate


def gru_kernel(x_ref, wih_ref, whh_ref, bxg_ref, bhn_ref, out_ref, *, B, T, G):
    """Whole GRU recurrence in one kernel invocation.

    x_ref   : (T*B, In)   VMEM  row t*B + b is step t of sequence b
    wih_ref : (In, 3G)    VMEM  gates [r | z | n], each in its own 128-lane slot
    whh_ref : (G, 3G)     VMEM  rows >= H zero-padded (h carried lane-dense)
    bxg_ref : (1, 3G)     VMEM  b_ih + [b_hr | b_hz | 0]   (rz fold hoisted)
    bhn_ref : (1, G)      VMEM  b_hn (must stay inside r * (...))
    out_ref : (T*B, G)    VMEM  all hidden states, lane-dense, padded lanes = 0
    """
    # Hoisted input projection: one (T*B, In) @ (In, 3G) MXU push for all steps
    # of all sequences; only h @ Whh remains on the serial chain.
    xg = jnp.dot(x_ref[...], wih_ref[...],
                 preferred_element_type=jnp.float32) + bxg_ref[...]

    whh = whh_ref[...]
    bhn = bhn_ref[...]

    h = jnp.zeros((B, G), jnp.float32)
    # Fully unrolled recurrence (T is compile-time static).
    for t in range(T):
        hg = jnp.dot(h, whh, preferred_element_type=jnp.float32)     # (B, 3G)
        xg_t = xg[t * B:(t + 1) * B, :]                               # (B, 3G) static slice
        # r and z slots are lane-adjacent vregs -> one fused EUP push.
        rz = jax.nn.sigmoid(xg_t[:, :2 * G] + hg[:, :2 * G])
        r = rz[:, :G]
        z = rz[:, G:]
        # PyTorch n-gate: tanh(x@W_in + b_in + r * (h@W_hn + b_hn))
        n = jnp.tanh(xg_t[:, 2 * G:] + r * (hg[:, 2 * G:] + bhn))
        h = (1.0 - z) * n + z * h                                     # (B, G)
        # Per-step lane-dense row store (uses the otherwise-idle vst slot).
        out_ref[t * B:(t + 1) * B, :] = h


def _run_gru(x_flat, wih_p, whh_p, bxg, bhn, *, B, T, G):
    """Single-invocation pallas_call (no grid — total footprint is tiny)."""
    return pl.pallas_call(
        partial(gru_kernel, B=B, T=T, G=G),
        out_shape=jax.ShapeDtypeStruct((T * B, G), jnp.float32),
        in_specs=[pl.BlockSpec(memory_space=pltpu.MemorySpace.VMEM)] * 5,
        out_specs=pl.BlockSpec(memory_space=pltpu.MemorySpace.VMEM),
    )(x_flat, wih_p, whh_p, bxg, bhn)


# ----------------------------- parameter prep -------------------------------

def make_gru_params(key, in_dim, hidden_dim):
    """PyTorch-style uniform(-1/sqrt(H), 1/sqrt(H)) init, logical fused layout.

    Returns wih (In, 3H), whh (H, 3H), bih (1, 3H), bhh (1, 3H) with gate
    order [r | z | n] along the last dim (PyTorch weight_{ih,hh}_l0 transposed).
    """
    bound = 1.0 / np.sqrt(hidden_dim)
    k1, k2, k3, k4 = jax.random.split(key, 4)
    wih = jax.random.uniform(k1, (in_dim, 3 * hidden_dim), jnp.float32, -bound, bound)
    whh = jax.random.uniform(k2, (hidden_dim, 3 * hidden_dim), jnp.float32, -bound, bound)
    bih = jax.random.uniform(k3, (1, 3 * hidden_dim), jnp.float32, -bound, bound)
    bhh = jax.random.uniform(k4, (1, 3 * hidden_dim), jnp.float32, -bound, bound)
    return wih, whh, bih, bhh


def _pad_gates(w, H, G):
    """(rows, 3H) -> (rows, 3G): gate g moves to lanes [g*G, g*G + H), rest 0."""
    rows = w.shape[0]
    out = jnp.zeros((rows, 3 * G), jnp.float32)
    for g in range(3):
        out = out.at[:, g * G:g * G + H].set(w[:, g * H:(g + 1) * H])
    return out


def prepare_gru_params(wih, whh, bih, bhh, hidden, G=GATE_LANES):
    """One-time layout prep (do this once per weight set, not per call):
       lane-align gates, lane-pad the hidden dim, fold b_hh[r|z] off-chain."""
    H = hidden
    wih_p = _pad_gates(wih, H, G)                                     # (In, 3G)
    whh_p = jnp.zeros((G, 3 * G), jnp.float32).at[:H, :].set(_pad_gates(whh, H, G))
    bih_p = _pad_gates(bih, H, G)                                     # (1, 3G)
    bhh_p = _pad_gates(bhh, H, G)                                     # (1, 3G)
    bxg = bih_p.at[:, :2 * G].add(bhh_p[:, :2 * G])                   # fold b_hr, b_hz
    bhn = bhh_p[:, 2 * G:]                                            # (1, G)
    return wih_p, whh_p, bxg, bhn


# ------------------------------- entry points --------------------------------

@partial(jax.jit, static_argnames=("out_hw",))
def gru_forward(x, wih_p, whh_p, bxg, bhn, *, out_hw):
    """Mirrors GRU.forward: x (T, H_in, W_in) -> (1, 10, out_h, out_w)."""
    T, hi, wi = x.shape
    out_h, out_w = out_hw
    H = out_h * out_w
    G = whh_p.shape[0]
    assert T == 10, "GRU.forward's final reshape requires sequence length 10"

    x_flat = x.reshape(T, hi * wi).astype(jnp.float32)      # == view(sh1, -1); B = 1
    out = _run_gru(x_flat, wih_p, whh_p, bxg, bhn, B=1, T=T, G=G)     # (T, G)
    hs = out[:, :H]                                          # drop lane padding
    # Attention branch: Attention.forward returns its input unchanged -> identity.
    # TODO(synk): Attention's internal linear/relu/softmax never affect the output.
    return hs.reshape(1, T, out_h, out_w)


@jax.jit
def gru_batched(xb, wih_p, whh_p, bxg, bhn):
    """Throughput path: B independent sequences ride the MXU M dimension.

    xb: (B, T, In) -> returns (B, T, G) lane-padded hidden states.
    """
    B, T, In = xb.shape
    G = whh_p.shape[0]
    # Step-major row layout so each step's B rows are a contiguous static slice.
    x_flat = jnp.transpose(xb, (1, 0, 2)).reshape(T * B, In).astype(jnp.float32)
    out = _run_gru(x_flat, wih_p, whh_p, bxg, bhn, B=B, T=T, G=G)     # (T*B, G)
    return jnp.transpose(out.reshape(T, B, G), (1, 0, 2))             # (B, T, G)


# -------------------------------- reference ----------------------------------

def gru_reference(xs, wih, whh, bih, bhh, H):
    """Pure-JAX reference of the same recurrence (logical fused layout).

    xs: (T, In) single flattened sequence -> (T, H) hidden states.
    """
    def step(h, x_t):
        xg = x_t[None, :] @ wih + bih
        hg = h @ whh + bhh
        r = jax.nn.sigmoid(xg[:, :H] + hg[:, :H])
        z = jax.nn.sigmoid(xg[:, H:2 * H] + hg[:, H:2 * H])
        n = jnp.tanh(xg[:, 2 * H:] + r * hg[:, 2 * H:])
        h_new = (1.0 - z) * n + z * h
        return h_new, h_new[0]

    _, hs = lax.scan(step, jnp.zeros((1, H), jnp.float32), xs.astype(jnp.float32))
    return hs                                                          # (T, H)


if __name__ == "__main__":
    # Task grids: input grid 4x4 (In = 16), output grid 4x4 (hidden = 16).
    # GRU.forward's final reshape implies sequence length T == 10.
    T, H_in, W_in = 10, 4, 4
    out_hw = (4, 4)
    hidden = out_hw[0] * out_hw[1]
    in_dim = H_in * W_in

    key = jax.random.PRNGKey(0)
    kx, kp, kb = jax.random.split(key, 3)
    x = jax.random.normal(kx, (T, H_in, W_in), jnp.float32)
    wih, whh, bih, bhh = make_gru_params(kp, in_dim, hidden)
    prepared = prepare_gru_params(wih, whh, bih, bhh, hidden)

    # --- module-semantics path (batch = 1, exactly GRU.forward) ---
    y = gru_forward(x, *prepared, out_hw=out_hw)
    y = jax.block_until_ready(y)
    assert y.shape == (1, T, out_hw[0], out_hw[1])
    ref = gru_reference(x.reshape(T, in_dim), wih, whh, bih, bhh, hidden)
    np.testing.assert_allclose(np.asarray(y).reshape(T, hidden), np.asarray(ref),
                               rtol=1e-5, atol=1e-5)

    # --- batched throughput path (independent sequences on the MXU M dim) ---
    B = 4
    xb = jax.random.normal(kb, (B, T, in_dim), jnp.float32)
    yb = jax.block_until_ready(gru_batched(xb, *prepared))[:, :, :hidden]
    ref_b = jax.vmap(lambda s: gru_reference(s, wih, whh, bih, bhh, hidden))(xb)
    np.testing.assert_allclose(np.asarray(yb), np.asarray(ref_b),
                               rtol=1e-5, atol=1e-5)

    print("KERNEL_OK")
</pallas_src>

<mosaic_0001>
module attributes {stable_mosaic.version = 11 : i64} {
  func.func @gru_kernel(%arg0: memref<10x16xf32, #tpu.memory_space<vmem>>, %arg1: memref<16x384xf32, #tpu.memory_space<vmem>>, %arg2: memref<128x384xf32, #tpu.memory_space<vmem>>, %arg3: memref<1x384xf32, #tpu.memory_space<vmem>>, %arg4: memref<1x128xf32, #tpu.memory_space<vmem>>, %arg5: memref<10x128xf32, #tpu.memory_space<vmem>>) attributes {dimension_semantics = [], scalar_prefetch = 0 : i64, scratch_operands = 0 : i64, tpu.core_type = #tpu.core_type<tc>} {
    %c0 = arith.constant 0 : index
    %c0_0 = arith.constant 0 : index
    %0 = vector.load %arg0[%c0, %c0_0] : memref<10x16xf32, #tpu.memory_space<vmem>>, vector<10x16xf32>
    %c0_1 = arith.constant 0 : index
    %c0_2 = arith.constant 0 : index
    %1 = vector.load %arg1[%c0_1, %c0_2] : memref<16x384xf32, #tpu.memory_space<vmem>>, vector<16x384xf32>
    %cst = arith.constant dense<0.000000e+00> : vector<10x384xf32>
    %2 = tpu.matmul %0, %1, %cst {dimension_numbers = #tpu.dot_dimension_numbers<[1], [0], [0], [1], [0, 0, 1, 1], [], []>} : vector<10x16xf32>, vector<16x384xf32>, vector<10x384xf32> -> vector<10x384xf32>
    %c0_3 = arith.constant 0 : index
    %c0_4 = arith.constant 0 : index
    %3 = vector.load %arg3[%c0_3, %c0_4] : memref<1x384xf32, #tpu.memory_space<vmem>>, vector<1x384xf32>
    %4 = vector.broadcast %3 : vector<1x384xf32> to vector<10x384xf32>
    %5 = arith.addf %2, %4 : vector<10x384xf32>
    %c0_5 = arith.constant 0 : index
    %c0_6 = arith.constant 0 : index
    %6 = vector.load %arg2[%c0_5, %c0_6] : memref<128x384xf32, #tpu.memory_space<vmem>>, vector<128x384xf32>
    %c0_7 = arith.constant 0 : index
    %c0_8 = arith.constant 0 : index
    %7 = vector.load %arg4[%c0_7, %c0_8] : memref<1x128xf32, #tpu.memory_space<vmem>>, vector<1x128xf32>
    %cst_9 = arith.constant 0.000000e+00 : f32
    %8 = vector.broadcast %cst_9 : f32 to vector<1x128xf32>
    %cst_10 = arith.constant dense<0.000000e+00> : vector<1x384xf32>
    %9 = tpu.matmul %8, %6, %cst_10 {dimension_numbers = #tpu.dot_dimension_numbers<[1], [0], [0], [1], [0, 0, 1, 1], [], []>} : vector<1x128xf32>, vector<128x384xf32>, vector<1x384xf32> -> vector<1x384xf32>
    %10 = vector.extract_strided_slice %5 {offsets = [0, 0], sizes = [1, 384], strides = [1, 1]} : vector<10x384xf32> to vector<1x384xf32>
    %11 = vector.extract_strided_slice %10 {offsets = [0, 0], sizes = [1, 256], strides = [1, 1]} : vector<1x384xf32> to vector<1x256xf32>
    %12 = vector.extract_strided_slice %9 {offsets = [0, 0], sizes = [1, 256], strides = [1, 1]} : vector<1x384xf32> to vector<1x256xf32>
    %13 = arith.addf %11, %12 : vector<1x256xf32>
    %14 = arith.negf %13 : vector<1x256xf32>
    %15 = math.exp %14 : vector<1x256xf32>
    %cst_11 = arith.constant 1.000000e+00 : f32
    %16 = vector.broadcast %cst_11 : f32 to vector<1x256xf32>
    %17 = arith.addf %16, %15 : vector<1x256xf32>
    %18 = arith.divf %16, %17 : vector<1x256xf32>
    %19 = vector.extract_strided_slice %18 {offsets = [0, 0], sizes = [1, 128], strides = [1, 1]} : vector<1x256xf32> to vector<1x128xf32>
    %20 = vector.extract_strided_slice %18 {offsets = [0, 128], sizes = [1, 128], strides = [1, 1]} : vector<1x256xf32> to vector<1x128xf32>
    %21 = vector.extract_strided_slice %10 {offsets = [0, 256], sizes = [1, 128], strides = [1, 1]} : vector<1x384xf32> to vector<1x128xf32>
    %22 = vector.extract_strided_slice %9 {offsets = [0, 256], sizes = [1, 128], strides = [1, 1]} : vector<1x384xf32> to vector<1x128xf32>
    %23 = arith.addf %22, %7 : vector<1x128xf32>
    %24 = arith.mulf %19, %23 : vector<1x128xf32>
    %25 = arith.addf %21, %24 : vector<1x128xf32>
    %26 = math.tanh %25 : vector<1x128xf32>
    %cst_12 = arith.constant 1.000000e+00 : f32
    %27 = vector.broadcast %cst_12 : f32 to vector<1x128xf32>
    %28 = arith.subf %27, %20 : vector<1x128xf32>
    %29 = arith.mulf %28, %26 : vector<1x128xf32>
    %30 = arith.mulf %20, %8 : vector<1x128xf32>
    %31 = arith.addf %29, %30 : vector<1x128xf32>
    %c0_13 = arith.constant 0 : index
    %c0_14 = arith.constant 0 : index
    %32 = vector.load %arg5[%c0_13, %c0_14] : memref<10x128xf32, #tpu.memory_space<vmem>>, vector<1x128xf32>
    tpu.vector_store %arg5[%c0_13, %c0_14], %31 {strides = array<i32>} : memref<10x128xf32, #tpu.memory_space<vmem>>, vector<1x128xf32>,
    %cst_15 = arith.constant dense<0.000000e+00> : vector<1x384xf32>
    %33 = tpu.matmul %31, %6, %cst_15 {dimension_numbers = #tpu.dot_dimension_numbers<[1], [0], [0], [1], [0, 0, 1, 1], [], []>} : vector<1x128xf32>, vector<128x384xf32>, vector<1x384xf32> -> vector<1x384xf32>
    %34 = vector.extract_strided_slice %5 {offsets = [1, 0], sizes = [1, 384], strides = [1, 1]} : vector<10x384xf32> to vector<1x384xf32>
    %35 = vector.extract_strided_slice %34 {offsets = [0, 0], sizes = [1, 256], strides = [1, 1]} : vector<1x384xf32> to vector<1x256xf32>
    %36 = vector.extract_strided_slice %33 {offsets = [0, 0], sizes = [1, 256], strides = [1, 1]} : vector<1x384xf32> to vector<1x256xf32>
    %37 = arith.addf %35, %36 : vector<1x256xf32>
    %38 = arith.negf %37 : vector<1x256xf32>
    %39 = math.exp %38 : vector<1x256xf32>
    %cst_16 = arith.constant 1.000000e+00 : f32
    %40 = vector.broadcast %cst_16 : f32 to vector<1x256xf32>
    %41 = arith.addf %40, %39 : vector<1x256xf32>
    %42 = arith.divf %40, %41 : vector<1x256xf32>
    %43 = vector.extract_strided_slice %42 {offsets = [0, 0], sizes = [1, 128], strides = [1, 1]} : vector<1x256xf32> to vector<1x128xf32>
    %44 = vector.extract_strided_slice %42 {offsets = [0, 128], sizes = [1, 128], strides = [1, 1]} : vector<1x256xf32> to vector<1x128xf32>
    %45 = vector.extract_strided_slice %34 {offsets = [0, 256], sizes = [1, 128], strides = [1, 1]} : vector<1x384xf32> to vector<1x128xf32>
    %46 = vector.extract_strided_slice %33 {offsets = [0, 256], sizes = [1, 128], strides = [1, 1]} : vector<1x384xf32> to vector<1x128xf32>
    %47 = arith.addf %46, %7 : vector<1x128xf32>
    %48 = arith.mulf %43, %47 : vector<1x128xf32>
    %49 = arith.addf %45, %48 : vector<1x128xf32>
    %50 = math.tanh %49 : vector<1x128xf32>
    %cst_17 = arith.constant 1.000000e+00 : f32
    %51 = vector.broadcast %cst_17 : f32 to vector<1x128xf32>
    %52 = arith.subf %51, %44 : vector<1x128xf32>
    %53 = arith.mulf %52, %50 : vector<1x128xf32>
    %54 = arith.mulf %44, %31 : vector<1x128xf32>
    %55 = arith.addf %53, %54 : vector<1x128xf32>
    %c1 = arith.constant 1 : index
    %c0_18 = arith.constant 0 : index
    %56 = vector.load %arg5[%c1, %c0_18] : memref<10x128xf32, #tpu.memory_space<vmem>>, vector<1x128xf32>
    tpu.vector_store %arg5[%c1, %c0_18], %55 {strides = array<i32>} : memref<10x128xf32, #tpu.memory_space<vmem>>, vector<1x128xf32>,
    %cst_19 = arith.constant dense<0.000000e+00> : vector<1x384xf32>
    %57 = tpu.matmul %55, %6, %cst_19 {dimension_numbers = #tpu.dot_dimension_numbers<[1], [0], [0], [1], [0, 0, 1, 1], [], []>} : vector<1x128xf32>, vector<128x384xf32>, vector<1x384xf32> -> vector<1x384xf32>
    %58 = vector.extract_strided_slice %5 {offsets = [2, 0], sizes = [1, 384], strides = [1, 1]} : vector<10x384xf32> to vector<1x384xf32>
    %59 = vector.extract_strided_slice %58 {offsets = [0, 0], sizes = [1, 256], strides = [1, 1]} : vector<1x384xf32> to vector<1x256xf32>
    %60 = vector.extract_strided_slice %57 {offsets = [0, 0], sizes = [1, 256], strides = [1, 1]} : vector<1x384xf32> to vector<1x256xf32>
    %61 = arith.addf %59, %60 : vector<1x256xf32>
    %62 = arith.negf %61 : vector<1x256xf32>
    %63 = math.exp %62 : vector<1x256xf32>
    %cst_20 = arith.constant 1.000000e+00 : f32
    %64 = vector.broadcast %cst_20 : f32 to vector<1x256xf32>
    %65 = arith.addf %64, %63 : vector<1x256xf32>
    %66 = arith.divf %64, %65 : vector<1x256xf32>
    %67 = vector.extract_strided_slice %66 {offsets = [0, 0], sizes = [1, 128], strides = [1, 1]} : vector<1x256xf32> to vector<1x128xf32>
    %68 = vector.extract_strided_slice %66 {offsets = [0, 128], sizes = [1, 128], strides = [1, 1]} : vector<1x256xf32> to vector<1x128xf32>
    %69 = vector.extract_strided_slice %58 {offsets = [0, 256], sizes = [1, 128], strides = [1, 1]} : vector<1x384xf32> to vector<1x128xf32>
    %70 = vector.extract_strided_slice %57 {offsets = [0, 256], sizes = [1, 128], strides = [1, 1]} : vector<1x384xf32> to vector<1x128xf32>
    %71 = arith.addf %70, %7 : vector<1x128xf32>
    %72 = arith.mulf %67, %71 : vector<1x128xf32>
    %73 = arith.addf %69, %72 : vector<1x128xf32>
    %74 = math.tanh %73 : vector<1x128xf32>
    %cst_21 = arith.constant 1.000000e+00 : f32
    %75 = vector.broadcast %cst_21 : f32 to vector<1x128xf32>
    %76 = arith.subf %75, %68 : vector<1x128xf32>
    %77 = arith.mulf %76, %74 : vector<1x128xf32>
    %78 = arith.mulf %68, %55 : vector<1x128xf32>
    %79 = arith.addf %77, %78 : vector<1x128xf32>
    %c2 = arith.constant 2 : index
    %c0_22 = arith.constant 0 : index
    %80 = vector.load %arg5[%c2, %c0_22] : memref<10x128xf32, #tpu.memory_space<vmem>>, vector<1x128xf32>
    tpu.vector_store %arg5[%c2, %c0_22], %79 {strides = array<i32>} : memref<10x128xf32, #tpu.memory_space<vmem>>, vector<1x128xf32>,
    %cst_23 = arith.constant dense<0.000000e+00> : vector<1x384xf32>
    %81 = tpu.matmul %79, %6, %cst_23 {dimension_numbers = #tpu.dot_dimension_numbers<[1], [0], [0], [1], [0, 0, 1, 1], [], []>} : vector<1x128xf32>, vector<128x384xf32>, vector<1x384xf32> -> vector<1x384xf32>
    %82 = vector.extract_strided_slice %5 {offsets = [3, 0], sizes = [1, 384], strides = [1, 1]} : vector<10x384xf32> to vector<1x384xf32>
    %83 = vector.extract_strided_slice %82 {offsets = [0, 0], sizes = [1, 256], strides = [1, 1]} : vector<1x384xf32> to vector<1x256xf32>
    %84 = vector.extract_strided_slice %81 {offsets = [0, 0], sizes = [1, 256], strides = [1, 1]} : vector<1x384xf32> to vector<1x256xf32>
    %85 = arith.addf %83, %84 : vector<1x256xf32>
    %86 = arith.negf %85 : vector<1x256xf32>
    %87 = math.exp %86 : vector<1x256xf32>
    %cst_24 = arith.constant 1.000000e+00 : f32
    %88 = vector.broadcast %cst_24 : f32 to vector<1x256xf32>
    %89 = arith.addf %88, %87 : vector<1x256xf32>
    %90 = arith.divf %88, %89 : vector<1x256xf32>
    %91 = vector.extract_strided_slice %90 {offsets = [0, 0], sizes = [1, 128], strides = [1, 1]} : vector<1x256xf32> to vector<1x128xf32>
    %92 = vector.extract_strided_slice %90 {offsets = [0, 128], sizes = [1, 128], strides = [1, 1]} : vector<1x256xf32> to vector<1x128xf32>
    %93 = vector.extract_strided_slice %82 {offsets = [0, 256], sizes = [1, 128], strides = [1, 1]} : vector<1x384xf32> to vector<1x128xf32>
    %94 = vector.extract_strided_slice %81 {offsets = [0, 256], sizes = [1, 128], strides = [1, 1]} : vector<1x384xf32> to vector<1x128xf32>
    %95 = arith.addf %94, %7 : vector<1x128xf32>
    %96 = arith.mulf %91, %95 : vector<1x128xf32>
    %97 = arith.addf %93, %96 : vector<1x128xf32>
    %98 = math.tanh %97 : vector<1x128xf32>
    %cst_25 = arith.constant 1.000000e+00 : f32
    %99 = vector.broadcast %cst_25 : f32 to vector<1x128xf32>
    %100 = arith.subf %99, %92 : vector<1x128xf32>
    %101 = arith.mulf %100, %98 : vector<1x128xf32>
    %102 = arith.mulf %92, %79 : vector<1x128xf32>
    %103 = arith.addf %101, %102 : vector<1x128xf32>
    %c3 = arith.constant 3 : index
    %c0_26 = arith.constant 0 : index
    %104 = vector.load %arg5[%c3, %c0_26] : memref<10x128xf32, #tpu.memory_space<vmem>>, vector<1x128xf32>
    tpu.vector_store %arg5[%c3, %c0_26], %103 {strides = array<i32>} : memref<10x128xf32, #tpu.memory_space<vmem>>, vector<1x128xf32>,
    %cst_27 = arith.constant dense<0.000000e+00> : vector<1x384xf32>
    %105 = tpu.matmul %103, %6, %cst_27 {dimension_numbers = #tpu.dot_dimension_numbers<[1], [0], [0], [1], [0, 0, 1, 1], [], []>} : vector<1x128xf32>, vector<128x384xf32>, vector<1x384xf32> -> vector<1x384xf32>
    %106 = vector.extract_strided_slice %5 {offsets = [4, 0], sizes = [1, 384], strides = [1, 1]} : vector<10x384xf32> to vector<1x384xf32>
    %107 = vector.extract_strided_slice %106 {offsets = [0, 0], sizes = [1, 256], strides = [1, 1]} : vector<1x384xf32> to vector<1x256xf32>
    %108 = vector.extract_strided_slice %105 {offsets = [0, 0], sizes = [1, 256], strides = [1, 1]} : vector<1x384xf32> to vector<1x256xf32>
    %109 = arith.addf %107, %108 : vector<1x256xf32>
    %110 = arith.negf %109 : vector<1x256xf32>
    %111 = math.exp %110 : vector<1x256xf32>
    %cst_28 = arith.constant 1.000000e+00 : f32
    %112 = vector.broadcast %cst_28 : f32 to vector<1x256xf32>
    %113 = arith.addf %112, %111 : vector<1x256xf32>
    %114 = arith.divf %112, %113 : vector<1x256xf32>
    %115 = vector.extract_strided_slice %114 {offsets = [0, 0], sizes = [1, 128], strides = [1, 1]} : vector<1x256xf32> to vector<1x128xf32>
    %116 = vector.extract_strided_slice %114 {offsets = [0, 128], sizes = [1, 128], strides = [1, 1]} : vector<1x256xf32> to vector<1x128xf32>
    %117 = vector.extract_strided_slice %106 {offsets = [0, 256], sizes = [1, 128], strides = [1, 1]} : vector<1x384xf32> to vector<1x128xf32>
    %118 = vector.extract_strided_slice %105 {offsets = [0, 256], sizes = [1, 128], strides = [1, 1]} : vector<1x384xf32> to vector<1x128xf32>
    %119 = arith.addf %118, %7 : vector<1x128xf32>
    %120 = arith.mulf %115, %119 : vector<1x128xf32>
    %121 = arith.addf %117, %120 : vector<1x128xf32>
    %122 = math.tanh %121 : vector<1x128xf32>
    %cst_29 = arith.constant 1.000000e+00 : f32
    %123 = vector.broadcast %cst_29 : f32 to vector<1x128xf32>
    %124 = arith.subf %123, %116 : vector<1x128xf32>
    %125 = arith.mulf %124, %122 : vector<1x128xf32>
    %126 = arith.mulf %116, %103 : vector<1x128xf32>
    %127 = arith.addf %125, %126 : vector<1x128xf32>
    %c4 = arith.constant 4 : index
    %c0_30 = arith.constant 0 : index
    %128 = vector.load %arg5[%c4, %c0_30] : memref<10x128xf32, #tpu.memory_space<vmem>>, vector<1x128xf32>
    tpu.vector_store %arg5[%c4, %c0_30], %127 {strides = array<i32>} : memref<10x128xf32, #tpu.memory_space<vmem>>, vector<1x128xf32>,
    %cst_31 = arith.constant dense<0.000000e+00> : vector<1x384xf32>
    %129 = tpu.matmul %127, %6, %cst_31 {dimension_numbers = #tpu.dot_dimension_numbers<[1], [0], [0], [1], [0, 0, 1, 1], [], []>} : vector<1x128xf32>, vector<128x384xf32>, vector<1x384xf32> -> vector<1x384xf32>
    %130 = vector.extract_strided_slice %5 {offsets = [5, 0], sizes = [1, 384], strides = [1, 1]} : vector<10x384xf32> to vector<1x384xf32>
    %131 = vector.extract_strided_slice %130 {offsets = [0, 0], sizes = [1, 256], strides = [1, 1]} : vector<1x384xf32> to vector<1x256xf32>
    %132 = vector.extract_strided_slice %129 {offsets = [0, 0], sizes = [1, 256], strides = [1, 1]} : vector<1x384xf32> to vector<1x256xf32>
    %133 = arith.addf %131, %132 : vector<1x256xf32>
    %134 = arith.negf %133 : vector<1x256xf32>
    %135 = math.exp %134 : vector<1x256xf32>
    %cst_32 = arith.constant 1.000000e+00 : f32
    %136 = vector.broadcast %cst_32 : f32 to vector<1x256xf32>
    %137 = arith.addf %136, %135 : vector<1x256xf32>
    %138 = arith.divf %136, %137 : vector<1x256xf32>
    %139 = vector.extract_strided_slice %138 {offsets = [0, 0], sizes = [1, 128], strides = [1, 1]} : vector<1x256xf32> to vector<1x128xf32>
    %140 = vector.extract_strided_slice %138 {offsets = [0, 128], sizes = [1, 128], strides = [1, 1]} : vector<1x256xf32> to vector<1x128xf32>
    %141 = vector.extract_strided_slice %130 {offsets = [0, 256], sizes = [1, 128], strides = [1, 1]} : vector<1x384xf32> to vector<1x128xf32>
    %142 = vector.extract_strided_slice %129 {offsets = [0, 256], sizes = [1, 128], strides = [1, 1]} : vector<1x384xf32> to vector<1x128xf32>
    %143 = arith.addf %142, %7 : vector<1x128xf32>
    %144 = arith.mulf %139, %143 : vector<1x128xf32>
    %145 = arith.addf %141, %144 : vector<1x128xf32>
    %146 = math.tanh %145 : vector<1x128xf32>
    %cst_33 = arith.constant 1.000000e+00 : f32
    %147 = vector.broadcast %cst_33 : f32 to vector<1x128xf32>
    %148 = arith.subf %147, %140 : vector<1x128xf32>
    %149 = arith.mulf %148, %146 : vector<1x128xf32>
    %150 = arith.mulf %140, %127 : vector<1x128xf32>
    %151 = arith.addf %149, %150 : vector<1x128xf32>
    %c5 = arith.constant 5 : index
    %c0_34 = arith.constant 0 : index
    %152 = vector.load %arg5[%c5, %c0_34] : memref<10x128xf32, #tpu.memory_space<vmem>>, vector<1x128xf32>
    tpu.vector_store %arg5[%c5, %c0_34], %151 {strides = array<i32>} : memref<10x128xf32, #tpu.memory_space<vmem>>, vector<1x128xf32>,
    %cst_35 = arith.constant dense<0.000000e+00> : vector<1x384xf32>
    %153 = tpu.matmul %151, %6, %cst_35 {dimension_numbers = #tpu.dot_dimension_numbers<[1], [0], [0], [1], [0, 0, 1, 1], [], []>} : vector<1x128xf32>, vector<128x384xf32>, vector<1x384xf32> -> vector<1x384xf32>
    %154 = vector.extract_strided_slice %5 {offsets = [6, 0], sizes = [1, 384], strides = [1, 1]} : vector<10x384xf32> to vector<1x384xf32>
    %155 = vector.extract_strided_slice %154 {offsets = [0, 0], sizes = [1, 256], strides = [1, 1]} : vector<1x384xf32> to vector<1x256xf32>
    %156 = vector.extract_strided_slice %153 {offsets = [0, 0], sizes = [1, 256], strides = [1, 1]} : vector<1x384xf32> to vector<1x256xf32>
    %157 = arith.addf %155, %156 : vector<1x256xf32>
    %158 = arith.negf %157 : vector<1x256xf32>
    %159 = math.exp %158 : vector<1x256xf32>
    %cst_36 = arith.constant 1.000000e+00 : f32
    %160 = vector.broadcast %cst_36 : f32 to vector<1x256xf32>
    %161 = arith.addf %160, %159 : vector<1x256xf32>
    %162 = arith.divf %160, %161 : vector<1x256xf32>
    %163 = vector.extract_strided_slice %162 {offsets = [0, 0], sizes = [1, 128], strides = [1, 1]} : vector<1x256xf32> to vector<1x128xf32>
    %164 = vector.extract_strided_slice %162 {offsets = [0, 128], sizes = [1, 128], strides = [1, 1]} : vector<1x256xf32> to vector<1x128xf32>
    %165 = vector.extract_strided_slice %154 {offsets = [0, 256], sizes = [1, 128], strides = [1, 1]} : vector<1x384xf32> to vector<1x128xf32>
    %166 = vector.extract_strided_slice %153 {offsets = [0, 256], sizes = [1, 128], strides = [1, 1]} : vector<1x384xf32> to vector<1x128xf32>
    %167 = arith.addf %166, %7 : vector<1x128xf32>
    %168 = arith.mulf %163, %167 : vector<1x128xf32>
    %169 = arith.addf %165, %168 : vector<1x128xf32>
    %170 = math.tanh %169 : vector<1x128xf32>
    %cst_37 = arith.constant 1.000000e+00 : f32
    %171 = vector.broadcast %cst_37 : f32 to vector<1x128xf32>
    %172 = arith.subf %171, %164 : vector<1x128xf32>
    %173 = arith.mulf %172, %170 : vector<1x128xf32>
    %174 = arith.mulf %164, %151 : vector<1x128xf32>
    %175 = arith.addf %173, %174 : vector<1x128xf32>
    %c6 = arith.constant 6 : index
    %c0_38 = arith.constant 0 : index
    %176 = vector.load %arg5[%c6, %c0_38] : memref<10x128xf32, #tpu.memory_space<vmem>>, vector<1x128xf32>
    tpu.vector_store %arg5[%c6, %c0_38], %175 {strides = array<i32>} : memref<10x128xf32, #tpu.memory_space<vmem>>, vector<1x128xf32>,
    %cst_39 = arith.constant dense<0.000000e+00> : vector<1x384xf32>
    %177 = tpu.matmul %175, %6, %cst_39 {dimension_numbers = #tpu.dot_dimension_numbers<[1], [0], [0], [1], [0, 0, 1, 1], [], []>} : vector<1x128xf32>, vector<128x384xf32>, vector<1x384xf32> -> vector<1x384xf32>
    %178 = vector.extract_strided_slice %5 {offsets = [7, 0], sizes = [1, 384], strides = [1, 1]} : vector<10x384xf32> to vector<1x384xf32>
    %179 = vector.extract_strided_slice %178 {offsets = [0, 0], sizes = [1, 256], strides = [1, 1]} : vector<1x384xf32> to vector<1x256xf32>
    %180 = vector.extract_strided_slice %177 {offsets = [0, 0], sizes = [1, 256], strides = [1, 1]} : vector<1x384xf32> to vector<1x256xf32>
    %181 = arith.addf %179, %180 : vector<1x256xf32>
    %182 = arith.negf %181 : vector<1x256xf32>
    %183 = math.exp %182 : vector<1x256xf32>
    %cst_40 = arith.constant 1.000000e+00 : f32
    %184 = vector.broadcast %cst_40 : f32 to vector<1x256xf32>
    %185 = arith.addf %184, %183 : vector<1x256xf32>
    %186 = arith.divf %184, %185 : vector<1x256xf32>
    %187 = vector.extract_strided_slice %186 {offsets = [0, 0], sizes = [1, 128], strides = [1, 1]} : vector<1x256xf32> to vector<1x128xf32>
    %188 = vector.extract_strided_slice %186 {offsets = [0, 128], sizes = [1, 128], strides = [1, 1]} : vector<1x256xf32> to vector<1x128xf32>
    %189 = vector.extract_strided_slice %178 {offsets = [0, 256], sizes = [1, 128], strides = [1, 1]} : vector<1x384xf32> to vector<1x128xf32>
    %190 = vector.extract_strided_slice %177 {offsets = [0, 256], sizes = [1, 128], strides = [1, 1]} : vector<1x384xf32> to vector<1x128xf32>
    %191 = arith.addf %190, %7 : vector<1x128xf32>
    %192 = arith.mulf %187, %191 : vector<1x128xf32>
    %193 = arith.addf %189, %192 : vector<1x128xf32>
    %194 = math.tanh %193 : vector<1x128xf32>
    %cst_41 = arith.constant 1.000000e+00 : f32
    %195 = vector.broadcast %cst_41 : f32 to vector<1x128xf32>
    %196 = arith.subf %195, %188 : vector<1x128xf32>
    %197 = arith.mulf %196, %194 : vector<1x128xf32>
    %198 = arith.mulf %188, %175 : vector<1x128xf32>
    %199 = arith.addf %197, %198 : vector<1x128xf32>
    %c7 = arith.constant 7 : index
    %c0_42 = arith.constant 0 : index
    %200 = vector.load %arg5[%c7, %c0_42] : memref<10x128xf32, #tpu.memory_space<vmem>>, vector<1x128xf32>
    tpu.vector_store %arg5[%c7, %c0_42], %199 {strides = array<i32>} : memref<10x128xf32, #tpu.memory_space<vmem>>, vector<1x128xf32>,
    %cst_43 = arith.constant dense<0.000000e+00> : vector<1x384xf32>
    %201 = tpu.matmul %199, %6, %cst_43 {dimension_numbers = #tpu.dot_dimension_numbers<[1], [0], [0], [1], [0, 0, 1, 1], [], []>} : vector<1x128xf32>, vector<128x384xf32>, vector<1x384xf32> -> vector<1x384xf32>
    %202 = vector.extract_strided_slice %5 {offsets = [8, 0], sizes = [1, 384], strides = [1, 1]} : vector<10x384xf32> to vector<1x384xf32>
    %203 = vector.extract_strided_slice %202 {offsets = [0, 0], sizes = [1, 256], strides = [1, 1]} : vector<1x384xf32> to vector<1x256xf32>
    %204 = vector.extract_strided_slice %201 {offsets = [0, 0], sizes = [1, 256], strides = [1, 1]} : vector<1x384xf32> to vector<1x256xf32>
    %205 = arith.addf %203, %204 : vector<1x256xf32>
    %206 = arith.negf %205 : vector<1x256xf32>
    %207 = math.exp %206 : vector<1x256xf32>
    %cst_44 = arith.constant 1.000000e+00 : f32
    %208 = vector.broadcast %cst_44 : f32 to vector<1x256xf32>
    %209 = arith.addf %208, %207 : vector<1x256xf32>
    %210 = arith.divf %208, %209 : vector<1x256xf32>
    %211 = vector.extract_strided_slice %210 {offsets = [0, 0], sizes = [1, 128], strides = [1, 1]} : vector<1x256xf32> to vector<1x128xf32>
    %212 = vector.extract_strided_slice %210 {offsets = [0, 128], sizes = [1, 128], strides = [1, 1]} : vector<1x256xf32> to vector<1x128xf32>
    %213 = vector.extract_strided_slice %202 {offsets = [0, 256], sizes = [1, 128], strides = [1, 1]} : vector<1x384xf32> to vector<1x128xf32>
    %214 = vector.extract_strided_slice %201 {offsets = [0, 256], sizes = [1, 128], strides = [1, 1]} : vector<1x384xf32> to vector<1x128xf32>
    %215 = arith.addf %214, %7 : vector<1x128xf32>
    %216 = arith.mulf %211, %215 : vector<1x128xf32>
    %217 = arith.addf %213, %216 : vector<1x128xf32>
    %218 = math.tanh %217 : vector<1x128xf32>
    %cst_45 = arith.constant 1.000000e+00 : f32
    %219 = vector.broadcast %cst_45 : f32 to vector<1x128xf32>
    %220 = arith.subf %219, %212 : vector<1x128xf32>
    %221 = arith.mulf %220, %218 : vector<1x128xf32>
    %222 = arith.mulf %212, %199 : vector<1x128xf32>
    %223 = arith.addf %221, %222 : vector<1x128xf32>
    %c8 = arith.constant 8 : index
    %c0_46 = arith.constant 0 : index
    %224 = vector.load %arg5[%c8, %c0_46] : memref<10x128xf32, #tpu.memory_space<vmem>>, vector<1x128xf32>
    tpu.vector_store %arg5[%c8, %c0_46], %223 {strides = array<i32>} : memref<10x128xf32, #tpu.memory_space<vmem>>, vector<1x128xf32>,
    %cst_47 = arith.constant dense<0.000000e+00> : vector<1x384xf32>
    %225 = tpu.matmul %223, %6, %cst_47 {dimension_numbers = #tpu.dot_dimension_numbers<[1], [0], [0], [1], [0, 0, 1, 1], [], []>} : vector<1x128xf32>, vector<128x384xf32>, vector<1x384xf32> -> vector<1x384xf32>
    %226 = vector.extract_strided_slice %5 {offsets = [9, 0], sizes = [1, 384], strides = [1, 1]} : vector<10x384xf32> to vector<1x384xf32>
    %227 = vector.extract_strided_slice %226 {offsets = [0, 0], sizes = [1, 256], strides = [1, 1]} : vector<1x384xf32> to vector<1x256xf32>
    %228 = vector.extract_strided_slice %225 {offsets = [0, 0], sizes = [1, 256], strides = [1, 1]} : vector<1x384xf32> to vector<1x256xf32>
    %229 = arith.addf %227, %228 : vector<1x256xf32>
    %230 = arith.negf %229 : vector<1x256xf32>
    %231 = math.exp %230 : vector<1x256xf32>
    %cst_48 = arith.constant 1.000000e+00 : f32
    %232 = vector.broadcast %cst_48 : f32 to vector<1x256xf32>
    %233 = arith.addf %232, %231 : vector<1x256xf32>
    %234 = arith.divf %232, %233 : vector<1x256xf32>
    %235 = vector.extract_strided_slice %234 {offsets = [0, 0], sizes = [1, 128], strides = [1, 1]} : vector<1x256xf32> to vector<1x128xf32>
    %236 = vector.extract_strided_slice %234 {offsets = [0, 128], sizes = [1, 128], strides = [1, 1]} : vector<1x256xf32> to vector<1x128xf32>
    %237 = vector.extract_strided_slice %226 {offsets = [0, 256], sizes = [1, 128], strides = [1, 1]} : vector<1x384xf32> to vector<1x128xf32>
    %238 = vector.extract_strided_slice %225 {offsets = [0, 256], sizes = [1, 128], strides = [1, 1]} : vector<1x384xf32> to vector<1x128xf32>
    %239 = arith.addf %238, %7 : vector<1x128xf32>
    %240 = arith.mulf %235, %239 : vector<1x128xf32>
    %241 = arith.addf %237, %240 : vector<1x128xf32>
    %242 = math.tanh %241 : vector<1x128xf32>
    %cst_49 = arith.constant 1.000000e+00 : f32
    %243 = vector.broadcast %cst_49 : f32 to vector<1x128xf32>
    %244 = arith.subf %243, %236 : vector<1x128xf32>
    %245 = arith.mulf %244, %242 : vector<1x128xf32>
    %246 = arith.mulf %236, %223 : vector<1x128xf32>
    %247 = arith.addf %245, %246 : vector<1x128xf32>
    %c9 = arith.constant 9 : index
    %c0_50 = arith.constant 0 : index
    %248 = vector.load %arg5[%c9, %c0_50] : memref<10x128xf32, #tpu.memory_space<vmem>>, vector<1x128xf32>
    tpu.vector_store %arg5[%c9, %c0_50], %247 {strides = array<i32>} : memref<10x128xf32, #tpu.memory_space<vmem>>, vector<1x128xf32>,
    return
  }
}

</mosaic_0001>

<llo_original>
// kernel: gru_forward.1
$region0: #{gru_forward.1}
  #allocation0 [shape = 'u32[]', space=smem, size = 0x4, offset = 0x4, fixed_abs, tag = 'smem constant byte address 0x4 - core index']
  #allocation1 [shape = 'u32[72,128]{1,0:T(1,128)}', space=vmem, size = 0x9000, scoped, tag = 'internal scratch']
  %s0 = inlined_call_operand.vmem [shape: f32[10,16], index: 0, kind: input, shape index: {}]
  %s1 = inlined_call_operand.hbm [shape: f32[16,384], index: 1, kind: input, shape index: {}]
  %s2 = inlined_call_operand.hbm [shape: f32[128,384], index: 2, kind: input, shape index: {}]
  %s3 = inlined_call_operand.vmem [shape: f32[1,384], index: 3, kind: input, shape index: {}]
  %s4 = inlined_call_operand.vmem [shape: f32[1,128], index: 4, kind: input, shape index: {}]
  %s5 = inlined_call_operand.vmem [shape: f32[10,128], index: 5, kind: output, shape index: {}]
  %s6 = sld [smem:[#allocation0]]
  $region38: #{gru_forward.1} parent=0
    _
  %s8 = ssub.s32 1, %s6
  %s9 = scalar_select 0, %s8, %s6
  $region1: #{gru_forward.1} parent=0
    #allocation2 [shape = 'u8[24576]{0}', space=vmem, size = 0x6000, scoped, tag = 'input window, operand 1, single buffered']
    #allocation3 [shape = 's32[1]{0}', space=sflag, size = 0x4, scoped, tag = 'scoped memory for gru_forward.1']
    #allocation4 [shape = 'u8[196608]{0}', space=vmem, size = 0x30000, scoped, tag = 'input window, operand 2, single buffered']
    #allocation5 [shape = 's32[1]{0}', space=sflag, size = 0x4, scoped, tag = 'scoped memory for gru_forward.1']
    %10 = vsyncpa [#allocation3], 0
    %11 = vsyncpa [#allocation5], 0
    // Predicated region
    $region2: #{gru_forward.1} parent=1 // pred_check
      _
    $region3: #{gru_forward.1} parent=1 // pred_check_branch
      %13 = sbr.rel (0) target = $region5
    $region4: #{gru_forward.1} parent=1 // pred_region
      _
    $region5: #{gru_forward.1} parent=1 // pred_fallthru
      _
    // Predicated region
    $region6: #{gru_forward.1} parent=1 // pred_check
      _
    $region7: #{gru_forward.1} parent=1 // pred_check_branch
      %15 = sbr.rel (0) target = $region9
    $region8: #{gru_forward.1} parent=1 // pred_region
      %17 = vsyncadd [#allocation3], 0
      %s18 = sshll.u32 %s1, 4
      %s19 = int_to_ptr.hbm [resolvable:$true] %s18
      %s20 = sshll.u32 [#allocation2], 4
      %s21 = int_to_ptr.vmem [resolvable:$true] %s20
      %26 = dma.hbm_to_vmem [thread:$0]  %s19, 768, %s21, [#allocation3], 384, 384, 24
    $region9: #{gru_forward.1} parent=1 // pred_fallthru
      _
    // Predicated region
    $region10: #{gru_forward.1} parent=1 // pred_check
      _
    $region11: #{gru_forward.1} parent=1 // pred_check_branch
      %28 = sbr.rel (0) target = $region13
    $region12: #{gru_forward.1} parent=1 // pred_region
      %30 = vsyncadd [#allocation5], 0
      %s31 = sshll.u32 %s2, 4
      %s32 = int_to_ptr.hbm [resolvable:$true] %s31
      %s33 = sshll.u32 [#allocation4], 4
      %s34 = int_to_ptr.vmem [resolvable:$true] %s33
      %39 = dma.hbm_to_vmem [thread:$0]  %s32, 6144, %s34, [#allocation5], 384, 384, 24
    $region13: #{gru_forward.1} parent=1 // pred_fallthru
      _
    // Predicated region
    $region14: #{gru_forward.1} parent=1 // pred_check
      _
    $region15: #{gru_forward.1} parent=1 // pred_check_branch
      %41 = sbr.rel (0) target = $region17
    $region16: #{gru_forward.1} parent=1 // pred_region
      _
    $region17: #{gru_forward.1} parent=1 // pred_fallthru
      _
    // Predicated region
    $region18: #{gru_forward.1} parent=1 // pred_check
      _
    $region19: #{gru_forward.1} parent=1 // pred_check_branch
      %43 = sbr.rel (0) target = $region21
    $region20: #{gru_forward.1} parent=1 // pred_region
      _
    $region21: #{gru_forward.1} parent=1 // pred_fallthru
      _
    // Predicated region
    $region22: #{gru_forward.1} parent=1 // pred_check
      _
    $region23: #{gru_forward.1} parent=1 // pred_check_branch
      %45 = sbr.rel (0) target = $region25
    $region24: #{gru_forward.1} parent=1 // pred_region
      %47 = dma.done [#allocation3], 768
    $region25: #{gru_forward.1} parent=1 // pred_fallthru
      _
    // Predicated region
    $region26: #{gru_forward.1} parent=1 // pred_check
      _
    $region27: #{gru_forward.1} parent=1 // pred_check_branch
      %49 = sbr.rel (0) target = $region29
    $region28: #{gru_forward.1} parent=1 // pred_region
      %51 = dma.done [#allocation5], 6144
    $region29: #{gru_forward.1} parent=1 // pred_fallthru
      _
    %v52 = vld [vmem:[%s0] sm:$0xff]
    %v53 = vld [vmem:[%s0 + $0x8] sm:$0x3]
    %v54 = vld [vmem:[#allocation2] sm:$0xff]
    %v55 = vld [vmem:[#allocation2 + $0x8] sm:$0xff]
    %v56 = vld [vmem:[#allocation2 + $0x10] sm:$0xff]
    %v57 = vld [vmem:[#allocation2 + $0x18] sm:$0xff]
    %v58 = vld [vmem:[#allocation2 + $0x20] sm:$0xff]
    %v59 = vld [vmem:[#allocation2 + $0x28] sm:$0xff]
    %v60 = vld [vmem:[%s3] sm:$0x7]
    %v62 = vperm.slane %v60, 0
    %v63 = vperm.slane %v60, 1
    %v64 = vperm.slane %v60, 2
    %vm68 = vcmask 130048
    %v70 = vsel %vm68, %v52, 0
    %v73 = vsel %vm68, %v53, 0
    %75 = vmatpush.msra.mxu0 0.0
    %76 = vmatpush.msra.mxu0 0.0
    %77 = vmatpush.msra.mxu0 0.0
    %78 = vmatpush.msra.mxu0 0.0
    %79 = vmatpush.msra.mxu0 0.0
    %80 = vmatpush.msra.mxu0 0.0
    %81 = vmatpush.msra.mxu0 0.0
    %82 = vmatpush.msra.mxu0 0.0
    %83 = vmatpush.msra.mxu0 0.0
    %84 = vmatpush.msra.mxu0 0.0
    %85 = vmatpush.msra.mxu0 0.0
    %86 = vmatpush.msra.mxu0 0.0
    %87 = vmatpush.msra.mxu0 0.0
    %88 = vmatpush.msra.mxu0 0.0
    %89 = vmatpush.msra.mxu0 %v57
    %90 = vmatpush.msra.mxu0 %v54
    %91 = vmatmul.f32.gmra.mxu0 %v70
    %v92 = vpop.f32.mrf.mxu0
    %v93 = vadd.f32 %v62, %v92
    %94 = vmatmul.f32.gmra.mxu0 %v73
    %v95 = vpop.f32.mrf.mxu0
    %v96 = vadd.f32 %v62, %v95
    %97 = vdwg.mxu0
    %98 = vmatpush.msra.mxu0 0.0
    %99 = vmatpush.msra.mxu0 0.0
    %100 = vmatpush.msra.mxu0 0.0
    %101 = vmatpush.msra.mxu0 0.0
    %102 = vmatpush.msra.mxu0 0.0
    %103 = vmatpush.msra.mxu0 0.0
    %104 = vmatpush.msra.mxu0 0.0
    %105 = vmatpush.msra.mxu0 0.0
    %106 = vmatpush.msra.mxu0 0.0
    %107 = vmatpush.msra.mxu0 0.0
    %108 = vmatpush.msra.mxu0 0.0
    %109 = vmatpush.msra.mxu0 0.0
    %110 = vmatpush.msra.mxu0 0.0
    %111 = vmatpush.msra.mxu0 0.0
    %112 = vmatpush.msra.mxu0 %v58
    %113 = vmatpush.msra.mxu0 %v55
    %114 = vmatmul.f32.gmra.mxu0 %v70
    %v115 = vpop.f32.mrf.mxu0
    %v116 = vadd.f32 %v63, %v115
    %117 = vmatmul.f32.gmra.mxu0 %v73
    %v118 = vpop.f32.mrf.mxu0
    %v119 = vadd.f32 %v63, %v118
    %120 = vdwg.mxu0
    %121 = vmatpush.msra.mxu0 0.0
    %122 = vmatpush.msra.mxu0 0.0
    %123 = vmatpush.msra.mxu0 0.0
    %124 = vmatpush.msra.mxu0 0.0
    %125 = vmatpush.msra.mxu0 0.0
    %126 = vmatpush.msra.mxu0 0.0
    %127 = vmatpush.msra.mxu0 0.0
    %128 = vmatpush.msra.mxu0 0.0
    %129 = vmatpush.msra.mxu0 0.0
    %130 = vmatpush.msra.mxu0 0.0
    %131 = vmatpush.msra.mxu0 0.0
    %132 = vmatpush.msra.mxu0 0.0
    %133 = vmatpush.msra.mxu0 0.0
    %134 = vmatpush.msra.mxu0 0.0
    %135 = vmatpush.msra.mxu0 %v59
    %136 = vmatpush.msra.mxu0 %v56
    %137 = vmatmul.f32.gmra.mxu0 %v70
    %v138 = vpop.f32.mrf.mxu0
    %v139 = vadd.f32 %v64, %v138
    %140 = vmatmul.f32.gmra.mxu0 %v73
    %v141 = vpop.f32.mrf.mxu0
    %v142 = vadd.f32 %v64, %v141
    %143 = vdwg.mxu0
    %v144 = vld [vmem:[#allocation4] sm:$0xff]
    %v145 = vld [vmem:[#allocation4 + $0x8] sm:$0xff]
    %v146 = vld [vmem:[#allocation4 + $0x10] sm:$0xff]
    %v147 = vld [vmem:[#allocation4 + $0x18] sm:$0xff]
    %v148 = vld [vmem:[#allocation4 + $0x20] sm:$0xff]
    %v149 = vld [vmem:[#allocation4 + $0x28] sm:$0xff]
    %v150 = vld [vmem:[#allocation4 + $0x30] sm:$0xff]
    %v151 = vld [vmem:[#allocation4 + $0x38] sm:$0xff]
    %v152 = vld [vmem:[#allocation4 + $0x40] sm:$0xff]
    %v153 = vld [vmem:[#allocation4 + $0x48] sm:$0xff]
    %v154 = vld [vmem:[#allocation4 + $0x50] sm:$0xff]
    %v155 = vld [vmem:[#allocation4 + $0x58] sm:$0xff]
    %v156 = vld [vmem:[#allocation4 + $0x60] sm:$0xff]
    %v157 = vld [vmem:[#allocation4 + $0x68] sm:$0xff]
    %v158 = vld [vmem:[#allocation4 + $0x70] sm:$0xff]
    %v159 = vld [vmem:[#allocation4 + $0x78] sm:$0xff]
    %v160 = vld [vmem:[#allocation4 + $0x80] sm:$0xff]
    %v161 = vld [vmem:[#allocation4 + $0x88] sm:$0xff]
    %v162 = vld [vmem:[#allocation4 + $0x90] sm:$0xff]
    %v163 = vld [vmem:[#allocation4 + $0x98] sm:$0xff]
    %v164 = vld [vmem:[#allocation4 + $0xa0] sm:$0xff]
    %v165 = vld [vmem:[#allocation4 + $0xa8] sm:$0xff]
    %v166 = vld [vmem:[#allocation4 + $0xb0] sm:$0xff]
    %v167 = vld [vmem:[#allocation4 + $0xb8] sm:$0xff]
    %v168 = vld [vmem:[#allocation4 + $0xc0] sm:$0xff]
    %v169 = vld [vmem:[#allocation4 + $0xc8] sm:$0xff]
    %v170 = vld [vmem:[#allocation4 + $0xd0] sm:$0xff]
    %v171 = vld [vmem:[#allocation4 + $0xd8] sm:$0xff]
    %v172 = vld [vmem:[#allocation4 + $0xe0] sm:$0xff]
    %v173 = vld [vmem:[#allocation4 + $0xe8] sm:$0xff]
    %v174 = vld [vmem:[#allocation4 + $0xf0] sm:$0xff]
    %v175 = vld [vmem:[#allocation4 + $0xf8] sm:$0xff]
    %v176 = vld [vmem:[#allocation4 + $0x100] sm:$0xff]
    %v177 = vld [vmem:[#allocation4 + $0x108] sm:$0xff]
    %v178 = vld [vmem:[#allocation4 + $0x110] sm:$0xff]
    %v179 = vld [vmem:[#allocation4 + $0x118] sm:$0xff]
    %v180 = vld [vmem:[#allocation4 + $0x120] sm:$0xff]
    %v181 = vld [vmem:[#allocation4 + $0x128] sm:$0xff]
    %v182 = vld [vmem:[#allocation4 + $0x130] sm:$0xff]
    %v183 = vld [vmem:[#allocation4 + $0x138] sm:$0xff]
    %v184 = vld [vmem:[#allocation4 + $0x140] sm:$0xff]
    %v185 = vld [vmem:[#allocation4 + $0x148] sm:$0xff]
    %v186 = vld [vmem:[#allocation4 + $0x150] sm:$0xff]
    %v187 = vld [vmem:[#allocation4 + $0x158] sm:$0xff]
    %v188 = vld [vmem:[#allocation4 + $0x160] sm:$0xff]
    %v189 = vld [vmem:[#allocation4 + $0x168] sm:$0xff]
    %v190 = vld [vmem:[#allocation4 + $0x170] sm:$0xff]
    %v191 = vld [vmem:[#allocation4 + $0x178] sm:$0xff]
    %v192 = vld [vmem:[%s4] sm:$0x1]
    %193 = vmatpush.msra.mxu0 %v189
    %194 = vmatpush.msra.mxu0 %v186
    %195 = vmatpush.msra.mxu0 %v183
    %196 = vmatpush.msra.mxu0 %v180
    %197 = vmatpush.msra.mxu0 %v177
    %198 = vmatpush.msra.mxu0 %v174
    %199 = vmatpush.msra.mxu0 %v171
    %200 = vmatpush.msra.mxu0 %v168
    %201 = vmatpush.msra.mxu0 %v165
    %202 = vmatpush.msra.mxu0 %v162
    %203 = vmatpush.msra.mxu0 %v159
    %204 = vmatpush.msra.mxu0 %v156
    %205 = vmatpush.msra.mxu0 %v153
    %206 = vmatpush.msra.mxu0 %v150
    %207 = vmatpush.msra.mxu0 %v147
    %208 = vmatpush.msra.mxu0 %v144
    %209 = vmatmul.f32.gmra.mxu0 0.0
    %v210 = vpop.f32.mrf.mxu0
    %v211 = vadd.f32 0.0, %v210
    %212 = vdwg.mxu0
    %213 = vmatpush.msra.mxu0 %v190
    %214 = vmatpush.msra.mxu0 %v187
    %215 = vmatpush.msra.mxu0 %v184
    %216 = vmatpush.msra.mxu0 %v181
    %217 = vmatpush.msra.mxu0 %v178
    %218 = vmatpush.msra.mxu0 %v175
    %219 = vmatpush.msra.mxu0 %v172
    %220 = vmatpush.msra.mxu0 %v169
    %221 = vmatpush.msra.mxu0 %v166
    %222 = vmatpush.msra.mxu0 %v163
    %223 = vmatpush.msra.mxu0 %v160
    %224 = vmatpush.msra.mxu0 %v157
    %225 = vmatpush.msra.mxu0 %v154
    %226 = vmatpush.msra.mxu0 %v151
    %227 = vmatpush.msra.mxu0 %v148
    %228 = vmatpush.msra.mxu0 %v145
    %229 = vmatmul.f32.gmra.mxu0 0.0
    %v230 = vpop.f32.mrf.mxu0
    %v231 = vadd.f32 0.0, %v230
    %232 = vdwg.mxu0
    %233 = vmatpush.msra.mxu0 %v191
    %234 = vmatpush.msra.mxu0 %v188
    %235 = vmatpush.msra.mxu0 %v185
    %236 = vmatpush.msra.mxu0 %v182
    %237 = vmatpush.msra.mxu0 %v179
    %238 = vmatpush.msra.mxu0 %v176
    %239 = vmatpush.msra.mxu0 %v173
    %240 = vmatpush.msra.mxu0 %v170
    %241 = vmatpush.msra.mxu0 %v167
    %242 = vmatpush.msra.mxu0 %v164
    %243 = vmatpush.msra.mxu0 %v161
    %244 = vmatpush.msra.mxu0 %v158
    %245 = vmatpush.msra.mxu0 %v155
    %246 = vmatpush.msra.mxu0 %v152
    %247 = vmatpush.msra.mxu0 %v149
    %248 = vmatpush.msra.mxu0 %v146
    %249 = vmatmul.f32.gmra.mxu0 0.0
    %v250 = vpop.f32.mrf.mxu0
    %v251 = vadd.f32 0.0, %v250
    %252 = vdwg.mxu0
    %v253 = vadd.f32 %v93, %v211
    %v254 = vadd.f32 %v116, %v231
    %v255 = vxor.u32 %v253, 2147483648
    %v256 = vxor.u32 %v254, 2147483648
    %v257 = vmul.f32 %v255, 1.442695
    %v258 = vpow.pop %v257
    %v259 = vmul.f32 %v256, 1.442695
    %v260 = vpow.pop %v259
    %v261 = vadd.f32 %v258, 1.0
    %v262 = vadd.f32 %v260, 1.0
    %v263 = vrcp.pop %v261
    %v264 = vmul.f32 %v261, %v263
    %v265 = vsub.f32 1.0, %v264
    %v266 = vmul.f32 %v263, %v265
    %v267 = vadd.f32 %v263, %v266
    %vm268 = vweird.f32 %v261
    %vm269 = vweird.f32 %v263
    %vm270 = vmor %vm268, %vm269
    %v271 = vsel %vm270, %v263, %v267
    %v272 = vand.u32 2147483647, %v261
    %vm273 = vcmp.eq.f32.partialorder %v272, 8.507059e+37
    %v274 = vand.u32 %v261, 2147483648
    %v275 = vor.u32 1.1754944e-38, %v274
    %v276 = vsel %vm273, %v275, %v271
    %v277 = vmul.f32 1.0, %v276
    %v278 = vrcp.pop %v262
    %v279 = vmul.f32 %v262, %v278
    %v280 = vsub.f32 1.0, %v279
    %v281 = vmul.f32 %v278, %v280
    %v282 = vadd.f32 %v278, %v281
    %vm283 = vweird.f32 %v262
    %vm284 = vweird.f32 %v278
    %vm285 = vmor %vm283, %vm284
    %v286 = vsel %vm285, %v278, %v282
    %v287 = vand.u32 2147483647, %v262
    %vm288 = vcmp.eq.f32.partialorder %v287, 8.507059e+37
    %v289 = vand.u32 %v262, 2147483648
    %v290 = vor.u32 1.1754944e-38, %v289
    %v291 = vsel %vm288, %v290, %v286
    %v292 = vmul.f32 1.0, %v291
    %v293 = vadd.f32 %v251, %v192
    %v294 = vmul.f32 %v277, %v293
    %v295 = vadd.f32 %v139, %v294
    %v296 = vtanh.pop %v295
    %v297 = vsub.f32 1.0, %v292
    %v298 = vmul.f32 %v297, %v296
    %v299 = vmul.f32 %v292, 0.0
    %v300 = vadd.f32 %v298, %v299
    %301 = vst [vmem:[%s5] sm:$0x1] %v300
    %302 = vmatpush.msra.mxu0 %v189
    %303 = vmatpush.msra.mxu0 %v186
    %304 = vmatpush.msra.mxu0 %v183
    %305 = vmatpush.msra.mxu0 %v180
    %306 = vmatpush.msra.mxu0 %v177
    %307 = vmatpush.msra.mxu0 %v174
    %308 = vmatpush.msra.mxu0 %v171
    %309 = vmatpush.msra.mxu0 %v168
    %310 = vmatpush.msra.mxu0 %v165
    %311 = vmatpush.msra.mxu0 %v162
    %312 = vmatpush.msra.mxu0 %v159
    %313 = vmatpush.msra.mxu0 %v156
    %314 = vmatpush.msra.mxu0 %v153
    %315 = vmatpush.msra.mxu0 %v150
    %316 = vmatpush.msra.mxu0 %v147
    %317 = vmatpush.msra.mxu0 %v144
    %318 = vmatmul.f32.gmra.mxu0 %v300
    %v319 = vpop.f32.mrf.mxu0
    %v320 = vadd.f32 0.0, %v319
    %321 = vdwg.mxu0
    %322 = vmatpush.msra.mxu0 %v190
    %323 = vmatpush.msra.mxu0 %v187
    %324 = vmatpush.msra.mxu0 %v184
    %325 = vmatpush.msra.mxu0 %v181
    %326 = vmatpush.msra.mxu0 %v178
    %327 = vmatpush.msra.mxu0 %v175
    %328 = vmatpush.msra.mxu0 %v172
    %329 = vmatpush.msra.mxu0 %v169
    %330 = vmatpush.msra.mxu0 %v166
    %331 = vmatpush.msra.mxu0 %v163
    %332 = vmatpush.msra.mxu0 %v160
    %333 = vmatpush.msra.mxu0 %v157
    %334 = vmatpush.msra.mxu0 %v154
    %335 = vmatpush.msra.mxu0 %v151
    %336 = vmatpush.msra.mxu0 %v148
    %337 = vmatpush.msra.mxu0 %v145
    %338 = vmatmul.f32.gmra.mxu0 %v300
    %v339 = vpop.f32.mrf.mxu0
    %v340 = vadd.f32 0.0, %v339
    %341 = vdwg.mxu0
    %342 = vmatpush.msra.mxu0 %v191
    %343 = vmatpush.msra.mxu0 %v188
    %344 = vmatpush.msra.mxu0 %v185
    %345 = vmatpush.msra.mxu0 %v182
    %346 = vmatpush.msra.mxu0 %v179
    %347 = vmatpush.msra.mxu0 %v176
    %348 = vmatpush.msra.mxu0 %v173
    %349 = vmatpush.msra.mxu0 %v170
    %350 = vmatpush.msra.mxu0 %v167
    %351 = vmatpush.msra.mxu0 %v164
    %352 = vmatpush.msra.mxu0 %v161
    %353 = vmatpush.msra.mxu0 %v158
    %354 = vmatpush.msra.mxu0 %v155
    %355 = vmatpush.msra.mxu0 %v152
    %356 = vmatpush.msra.mxu0 %v149
    %357 = vmatpush.msra.mxu0 %v146
    %358 = vmatmul.f32.gmra.mxu0 %v300
    %v359 = vpop.f32.mrf.mxu0
    %v360 = vadd.f32 0.0, %v359
    %361 = vdwg.mxu0
    %v364 = vrot.slane %v320, 7
    %v365 = vrot.slane %v340, 7
    %v368 = vadd.f32 %v93, %v364
    %v369 = vadd.f32 %v116, %v365
    %v370 = vxor.u32 %v368, 2147483648
    %v371 = vxor.u32 %v369, 2147483648
    %v372 = vmul.f32 %v370, 1.442695
    %v373 = vpow.pop %v372
    %v374 = vmul.f32 %v371, 1.442695
    %v375 = vpow.pop %v374
    %v376 = vadd.f32 %v373, 1.0
    %v377 = vadd.f32 %v375, 1.0
    %v378 = vrcp.pop %v376
    %v379 = vmul.f32 %v376, %v378
    %v380 = vsub.f32 1.0, %v379
    %v381 = vmul.f32 %v378, %v380
    %v382 = vadd.f32 %v378, %v381
    %vm383 = vweird.f32 %v376
    %vm384 = vweird.f32 %v378
    %vm385 = vmor %vm383, %vm384
    %v386 = vsel %vm385, %v378, %v382
    %v387 = vand.u32 2147483647, %v376
    %vm388 = vcmp.eq.f32.partialorder %v387, 8.507059e+37
    %v389 = vand.u32 %v376, 2147483648
    %v390 = vor.u32 1.1754944e-38, %v389
    %v391 = vsel %vm388, %v390, %v386
    %v392 = vmul.f32 1.0, %v391
    %v393 = vrcp.pop %v377
    %v394 = vmul.f32 %v377, %v393
    %v395 = vsub.f32 1.0, %v394
    %v396 = vmul.f32 %v393, %v395
    %v397 = vadd.f32 %v393, %v396
    %vm398 = vweird.f32 %v377
    %vm399 = vweird.f32 %v393
    %vm400 = vmor %vm398, %vm399
    %v401 = vsel %vm400, %v393, %v397
    %v402 = vand.u32 2147483647, %v377
    %vm403 = vcmp.eq.f32.partialorder %v402, 8.507059e+37
    %v404 = vand.u32 %v377, 2147483648
    %v405 = vor.u32 1.1754944e-38, %v404
    %v406 = vsel %vm403, %v405, %v401
    %v407 = vmul.f32 1.0, %v406
    %v408 = vadd.f32 %v360, %v192
    %v410 = vrot.slane %v408, 7
    %v412 = vmul.f32 %v392, %v410
    %v413 = vadd.f32 %v139, %v412
    %v414 = vtanh.pop %v413
    %v415 = vsub.f32 1.0, %v407
    %v416 = vmul.f32 %v415, %v414
    %v418 = vrot.slane %v300, 7
    %v420 = vmul.f32 %v407, %v418
    %v421 = vadd.f32 %v416, %v420
    %422 = vst [vmem:[%s5] sm:$0x2] %v421
    %v424 = vrot.slane %v421, 1
    %426 = vmatpush.msra.mxu0 %v189
    %427 = vmatpush.msra.mxu0 %v186
    %428 = vmatpush.msra.mxu0 %v183
    %429 = vmatpush.msra.mxu0 %v180
    %430 = vmatpush.msra.mxu0 %v177
    %431 = vmatpush.msra.mxu0 %v174
    %432 = vmatpush.msra.mxu0 %v171
    %433 = vmatpush.msra.mxu0 %v168
    %434 = vmatpush.msra.mxu0 %v165
    %435 = vmatpush.msra.mxu0 %v162
    %436 = vmatpush.msra.mxu0 %v159
    %437 = vmatpush.msra.mxu0 %v156
    %438 = vmatpush.msra.mxu0 %v153
    %439 = vmatpush.msra.mxu0 %v150
    %440 = vmatpush.msra.mxu0 %v147
    %441 = vmatpush.msra.mxu0 %v144
    %442 = vmatmul.f32.gmra.mxu0 %v424
    %v443 = vpop.f32.mrf.mxu0
    %v444 = vadd.f32 0.0, %v443
    %445 = vdwg.mxu0
    %446 = vmatpush.msra.mxu0 %v190
    %447 = vmatpush.msra.mxu0 %v187
    %448 = vmatpush.msra.mxu0 %v184
    %449 = vmatpush.msra.mxu0 %v181
    %450 = vmatpush.msra.mxu0 %v178
    %451 = vmatpush.msra.mxu0 %v175
    %452 = vmatpush.msra.mxu0 %v172
    %453 = vmatpush.msra.mxu0 %v169
    %454 = vmatpush.msra.mxu0 %v166
    %455 = vmatpush.msra.mxu0 %v163
    %456 = vmatpush.msra.mxu0 %v160
    %457 = vmatpush.msra.mxu0 %v157
    %458 = vmatpush.msra.mxu0 %v154
    %459 = vmatpush.msra.mxu0 %v151
    %460 = vmatpush.msra.mxu0 %v148
    %461 = vmatpush.msra.mxu0 %v145
    %462 = vmatmul.f32.gmra.mxu0 %v424
    %v463 = vpop.f32.mrf.mxu0
    %v464 = vadd.f32 0.0, %v463
    %465 = vdwg.mxu0
    %466 = vmatpush.msra.mxu0 %v191
    %467 = vmatpush.msra.mxu0 %v188
    %468 = vmatpush.msra.mxu0 %v185
    %469 = vmatpush.msra.mxu0 %v182
    %470 = vmatpush.msra.mxu0 %v179
    %471 = vmatpush.msra.mxu0 %v176
    %472 = vmatpush.msra.mxu0 %v173
    %473 = vmatpush.msra.mxu0 %v170
    %474 = vmatpush.msra.mxu0 %v167
    %475 = vmatpush.msra.mxu0 %v164
    %476 = vmatpush.msra.mxu0 %v161
    %477 = vmatpush.msra.mxu0 %v158
    %478 = vmatpush.msra.mxu0 %v155
    %479 = vmatpush.msra.mxu0 %v152
    %480 = vmatpush.msra.mxu0 %v149
    %481 = vmatpush.msra.mxu0 %v146
    %482 = vmatmul.f32.gmra.mxu0 %v424
    %v483 = vpop.f32.mrf.mxu0
    %v484 = vadd.f32 0.0, %v483
    %485 = vdwg.mxu0
    %v488 = vrot.slane %v444, 6
    %v489 = vrot.slane %v464, 6
    %v492 = vadd.f32 %v93, %v488
    %v493 = vadd.f32 %v116, %v489
    %v494 = vxor.u32 %v492, 2147483648
    %v495 = vxor.u32 %v493, 2147483648
    %v496 = vmul.f32 %v494, 1.442695
    %v497 = vpow.pop %v496
    %v498 = vmul.f32 %v495, 1.442695
    %v499 = vpow.pop %v498
    %v500 = vadd.f32 %v497, 1.0
    %v501 = vadd.f32 %v499, 1.0
    %v502 = vrcp.pop %v500
    %v503 = vmul.f32 %v500, %v502
    %v504 = vsub.f32 1.0, %v503
    %v505 = vmul.f32 %v502, %v504
    %v506 = vadd.f32 %v502, %v505
    %vm507 = vweird.f32 %v500
    %vm508 = vweird.f32 %v502
    %vm509 = vmor %vm507, %vm508
    %v510 = vsel %vm509, %v502, %v506
    %v511 = vand.u32 2147483647, %v500
    %vm512 = vcmp.eq.f32.partialorder %v511, 8.507059e+37
    %v513 = vand.u32 %v500, 2147483648
    %v514 = vor.u32 1.1754944e-38, %v513
    %v515 = vsel %vm512, %v514, %v510
    %v516 = vmul.f32 1.0, %v515
    %v517 = vrcp.pop %v501
    %v518 = vmul.f32 %v501, %v517
    %v519 = vsub.f32 1.0, %v518
    %v520 = vmul.f32 %v517, %v519
    %v521 = vadd.f32 %v517, %v520
    %vm522 = vweird.f32 %v501
    %vm523 = vweird.f32 %v517
    %vm524 = vmor %vm522, %vm523
    %v525 = vsel %vm524, %v517, %v521
    %v526 = vand.u32 2147483647, %v501
    %vm527 = vcmp.eq.f32.partialorder %v526, 8.507059e+37
    %v528 = vand.u32 %v501, 2147483648
    %v529 = vor.u32 1.1754944e-38, %v528
    %v530 = vsel %vm527, %v529, %v525
    %v531 = vmul.f32 1.0, %v530
    %v532 = vadd.f32 %v484, %v192
    %v534 = vrot.slane %v532, 6
    %v536 = vmul.f32 %v516, %v534
    %v537 = vadd.f32 %v139, %v536
    %v538 = vtanh.pop %v537
    %v539 = vsub.f32 1.0, %v531
    %v540 = vmul.f32 %v539, %v538
    %v541 = vrot.slane %v421, 7
    %v543 = vmul.f32 %v531, %v541
    %v544 = vadd.f32 %v540, %v543
    %545 = vst [vmem:[%s5] sm:$0x4] %v544
    %v547 = vrot.slane %v544, 2
    %549 = vmatpush.msra.mxu0 %v189
    %550 = vmatpush.msra.mxu0 %v186
    %551 = vmatpush.msra.mxu0 %v183
    %552 = vmatpush.msra.mxu0 %v180
    %553 = vmatpush.msra.mxu0 %v177
    %554 = vmatpush.msra.mxu0 %v174
    %555 = vmatpush.msra.mxu0 %v171
    %556 = vmatpush.msra.mxu0 %v168
    %557 = vmatpush.msra.mxu0 %v165
    %558 = vmatpush.msra.mxu0 %v162
    %559 = vmatpush.msra.mxu0 %v159
    %560 = vmatpush.msra.mxu0 %v156
    %561 = vmatpush.msra.mxu0 %v153
    %562 = vmatpush.msra.mxu0 %v150
    %563 = vmatpush.msra.mxu0 %v147
    %564 = vmatpush.msra.mxu0 %v144
    %565 = vmatmul.f32.gmra.mxu0 %v547
    %v566 = vpop.f32.mrf.mxu0
    %v567 = vadd.f32 0.0, %v566
    %568 = vdwg.mxu0
    %569 = vmatpush.msra.mxu0 %v190
    %570 = vmatpush.msra.mxu0 %v187
    %571 = vmatpush.msra.mxu0 %v184
    %572 = vmatpush.msra.mxu0 %v181
    %573 = vmatpush.msra.mxu0 %v178
    %574 = vmatpush.msra.mxu0 %v175
    %575 = vmatpush.msra.mxu0 %v172
    %576 = vmatpush.msra.mxu0 %v169
    %577 = vmatpush.msra.mxu0 %v166
    %578 = vmatpush.msra.mxu0 %v163
    %579 = vmatpush.msra.mxu0 %v160
    %580 = vmatpush.msra.mxu0 %v157
    %581 = vmatpush.msra.mxu0 %v154
    %582 = vmatpush.msra.mxu0 %v151
    %583 = vmatpush.msra.mxu0 %v148
    %584 = vmatpush.msra.mxu0 %v145
    %585 = vmatmul.f32.gmra.mxu0 %v547
    %v586 = vpop.f32.mrf.mxu0
    %v587 = vadd.f32 0.0, %v586
    %588 = vdwg.mxu0
    %589 = vmatpush.msra.mxu0 %v191
    %590 = vmatpush.msra.mxu0 %v188
    %591 = vmatpush.msra.mxu0 %v185
    %592 = vmatpush.msra.mxu0 %v182
    %593 = vmatpush.msra.mxu0 %v179
    %594 = vmatpush.msra.mxu0 %v176
    %595 = vmatpush.msra.mxu0 %v173
    %596 = vmatpush.msra.mxu0 %v170
    %597 = vmatpush.msra.mxu0 %v167
    %598 = vmatpush.msra.mxu0 %v164
    %599 = vmatpush.msra.mxu0 %v161
    %600 = vmatpush.msra.mxu0 %v158
    %601 = vmatpush.msra.mxu0 %v155
    %602 = vmatpush.msra.mxu0 %v152
    %603 = vmatpush.msra.mxu0 %v149
    %604 = vmatpush.msra.mxu0 %v146
    %605 = vmatmul.f32.gmra.mxu0 %v547
    %v606 = vpop.f32.mrf.mxu0
    %v607 = vadd.f32 0.0, %v606
    %608 = vdwg.mxu0
    %v611 = vrot.slane %v567, 5
    %v612 = vrot.slane %v587, 5
    %v615 = vadd.f32 %v93, %v611
    %v616 = vadd.f32 %v116, %v612
    %v617 = vxor.u32 %v615, 2147483648
    %v618 = vxor.u32 %v616, 2147483648
    %v619 = vmul.f32 %v617, 1.442695
    %v620 = vpow.pop %v619
    %v621 = vmul.f32 %v618, 1.442695
    %v622 = vpow.pop %v621
    %v623 = vadd.f32 %v620, 1.0
    %v624 = vadd.f32 %v622, 1.0
    %v625 = vrcp.pop %v623
    %v626 = vmul.f32 %v623, %v625
    %v627 = vsub.f32 1.0, %v626
    %v628 = vmul.f32 %v625, %v627
    %v629 = vadd.f32 %v625, %v628
    %vm630 = vweird.f32 %v623
    %vm631 = vweird.f32 %v625
    %vm632 = vmor %vm630, %vm631
    %v633 = vsel %vm632, %v625, %v629
    %v634 = vand.u32 2147483647, %v623
    %vm635 = vcmp.eq.f32.partialorder %v634, 8.507059e+37
    %v636 = vand.u32 %v623, 2147483648
    %v637 = vor.u32 1.1754944e-38, %v636
    %v638 = vsel %vm635, %v637, %v633
    %v639 = vmul.f32 1.0, %v638
    %v640 = vrcp.pop %v624
    %v641 = vmul.f32 %v624, %v640
    %v642 = vsub.f32 1.0, %v641
    %v643 = vmul.f32 %v640, %v642
    %v644 = vadd.f32 %v640, %v643
    %vm645 = vweird.f32 %v624
    %vm646 = vweird.f32 %v640
    %vm647 = vmor %vm645, %vm646
    %v648 = vsel %vm647, %v640, %v644
    %v649 = vand.u32 2147483647, %v624
    %vm650 = vcmp.eq.f32.partialorder %v649, 8.507059e+37
    %v651 = vand.u32 %v624, 2147483648
    %v652 = vor.u32 1.1754944e-38, %v651
    %v653 = vsel %vm650, %v652, %v648
    %v654 = vmul.f32 1.0, %v653
    %v655 = vadd.f32 %v607, %v192
    %v657 = vrot.slane %v655, 5
    %v659 = vmul.f32 %v639, %v657
    %v660 = vadd.f32 %v139, %v659
    %v661 = vtanh.pop %v660
    %v662 = vsub.f32 1.0, %v654
    %v663 = vmul.f32 %v662, %v661
    %v664 = vrot.slane %v544, 7
    %v666 = vmul.f32 %v654, %v664
    %v667 = vadd.f32 %v663, %v666
    %668 = vst [vmem:[%s5] sm:$0x8] %v667
    %v670 = vrot.slane %v667, 3
    %672 = vmatpush.msra.mxu0 %v189
    %673 = vmatpush.msra.mxu0 %v186
    %674 = vmatpush.msra.mxu0 %v183
    %675 = vmatpush.msra.mxu0 %v180
    %676 = vmatpush.msra.mxu0 %v177
    %677 = vmatpush.msra.mxu0 %v174
    %678 = vmatpush.msra.mxu0 %v171
    %679 = vmatpush.msra.mxu0 %v168
    %680 = vmatpush.msra.mxu0 %v165
    %681 = vmatpush.msra.mxu0 %v162
    %682 = vmatpush.msra.mxu0 %v159
    %683 = vmatpush.msra.mxu0 %v156
    %684 = vmatpush.msra.mxu0 %v153
    %685 = vmatpush.msra.mxu0 %v150
    %686 = vmatpush.msra.mxu0 %v147
    %687 = vmatpush.msra.mxu0 %v144
    %688 = vmatmul.f32.gmra.mxu0 %v670
    %v689 = vpop.f32.mrf.mxu0
    %v690 = vadd.f32 0.0, %v689
    %691 = vdwg.mxu0
    %692 = vmatpush.msra.mxu0 %v190
    %693 = vmatpush.msra.mxu0 %v187
    %694 = vmatpush.msra.mxu0 %v184
    %695 = vmatpush.msra.mxu0 %v181
    %696 = vmatpush.msra.mxu0 %v178
    %697 = vmatpush.msra.mxu0 %v175
    %698 = vmatpush.msra.mxu0 %v172
    %699 = vmatpush.msra.mxu0 %v169
    %700 = vmatpush.msra.mxu0 %v166
    %701 = vmatpush.msra.mxu0 %v163
    %702 = vmatpush.msra.mxu0 %v160
    %703 = vmatpush.msra.mxu0 %v157
    %704 = vmatpush.msra.mxu0 %v154
    %705 = vmatpush.msra.mxu0 %v151
    %706 = vmatpush.msra.mxu0 %v148
    %707 = vmatpush.msra.mxu0 %v145
    %708 = vmatmul.f32.gmra.mxu0 %v670
    %v709 = vpop.f32.mrf.mxu0
    %v710 = vadd.f32 0.0, %v709
    %711 = vdwg.mxu0
    %712 = vmatpush.msra.mxu0 %v191
    %713 = vmatpush.msra.mxu0 %v188
    %714 = vmatpush.msra.mxu0 %v185
    %715 = vmatpush.msra.mxu0 %v182
    %716 = vmatpush.msra.mxu0 %v179
    %717 = vmatpush.msra.mxu0 %v176
    %718 = vmatpush.msra.mxu0 %v173
    %719 = vmatpush.msra.mxu0 %v170
    %720 = vmatpush.msra.mxu0 %v167
    %721 = vmatpush.msra.mxu0 %v164
    %722 = vmatpush.msra.mxu0 %v161
    %723 = vmatpush.msra.mxu0 %v158
    %724 = vmatpush.msra.mxu0 %v155
    %725 = vmatpush.msra.mxu0 %v152
    %726 = vmatpush.msra.mxu0 %v149
    %727 = vmatpush.msra.mxu0 %v146
    %728 = vmatmul.f32.gmra.mxu0 %v670
    %v729 = vpop.f32.mrf.mxu0
    %v730 = vadd.f32 0.0, %v729
    %731 = vdwg.mxu0
    %v734 = vrot.slane %v690, 4
    %v735 = vrot.slane %v710, 4
    %v738 = vadd.f32 %v93, %v734
    %v739 = vadd.f32 %v116, %v735
    %v740 = vxor.u32 %v738, 2147483648
    %v741 = vxor.u32 %v739, 2147483648
    %v742 = vmul.f32 %v740, 1.442695
    %v743 = vpow.pop %v742
    %v744 = vmul.f32 %v741, 1.442695
    %v745 = vpow.pop %v744
    %v746 = vadd.f32 %v743, 1.0
    %v747 = vadd.f32 %v745, 1.0
    %v748 = vrcp.pop %v746
    %v749 = vmul.f32 %v746, %v748
    %v750 = vsub.f32 1.0, %v749
    %v751 = vmul.f32 %v748, %v750
    %v752 = vadd.f32 %v748, %v751
    %vm753 = vweird.f32 %v746
    %vm754 = vweird.f32 %v748
    %vm755 = vmor %vm753, %vm754
    %v756 = vsel %vm755, %v748, %v752
    %v757 = vand.u32 2147483647, %v746
    %vm758 = vcmp.eq.f32.partialorder %v757, 8.507059e+37
    %v759 = vand.u32 %v746, 2147483648
    %v760 = vor.u32 1.1754944e-38, %v759
    %v761 = vsel %vm758, %v760, %v756
    %v762 = vmul.f32 1.0, %v761
    %v763 = vrcp.pop %v747
    %v764 = vmul.f32 %v747, %v763
    %v765 = vsub.f32 1.0, %v764
    %v766 = vmul.f32 %v763, %v765
    %v767 = vadd.f32 %v763, %v766
    %vm768 = vweird.f32 %v747
    %vm769 = vweird.f32 %v763
    %vm770 = vmor %vm768, %vm769
    %v771 = vsel %vm770, %v763, %v767
    %v772 = vand.u32 2147483647, %v747
    %vm773 = vcmp.eq.f32.partialorder %v772, 8.507059e+37
    %v774 = vand.u32 %v747, 2147483648
    %v775 = vor.u32 1.1754944e-38, %v774
    %v776 = vsel %vm773, %v775, %v771
    %v777 = vmul.f32 1.0, %v776
    %v778 = vadd.f32 %v730, %v192
    %v780 = vrot.slane %v778, 4
    %v782 = vmul.f32 %v762, %v780
    %v783 = vadd.f32 %v139, %v782
    %v784 = vtanh.pop %v783
    %v785 = vsub.f32 1.0, %v777
    %v786 = vmul.f32 %v785, %v784
    %v787 = vrot.slane %v667, 7
    %v789 = vmul.f32 %v777, %v787
    %v790 = vadd.f32 %v786, %v789
    %791 = vst [vmem:[%s5] sm:$0x10] %v790
    %v793 = vrot.slane %v790, 4
    %795 = vmatpush.msra.mxu0 %v189
    %796 = vmatpush.msra.mxu0 %v186
    %797 = vmatpush.msra.mxu0 %v183
    %798 = vmatpush.msra.mxu0 %v180
    %799 = vmatpush.msra.mxu0 %v177
    %800 = vmatpush.msra.mxu0 %v174
    %801 = vmatpush.msra.mxu0 %v171
    %802 = vmatpush.msra.mxu0 %v168
    %803 = vmatpush.msra.mxu0 %v165
    %804 = vmatpush.msra.mxu0 %v162
    %805 = vmatpush.msra.mxu0 %v159
    %806 = vmatpush.msra.mxu0 %v156
    %807 = vmatpush.msra.mxu0 %v153
    %808 = vmatpush.msra.mxu0 %v150
    %809 = vmatpush.msra.mxu0 %v147
    %810 = vmatpush.msra.mxu0 %v144
    %811 = vmatmul.f32.gmra.mxu0 %v793
    %v812 = vpop.f32.mrf.mxu0
    %v813 = vadd.f32 0.0, %v812
    %814 = vdwg.mxu0
    %815 = vmatpush.msra.mxu0 %v190
    %816 = vmatpush.msra.mxu0 %v187
    %817 = vmatpush.msra.mxu0 %v184
    %818 = vmatpush.msra.mxu0 %v181
    %819 = vmatpush.msra.mxu0 %v178
    %820 = vmatpush.msra.mxu0 %v175
    %821 = vmatpush.msra.mxu0 %v172
    %822 = vmatpush.msra.mxu0 %v169
    %823 = vmatpush.msra.mxu0 %v166
    %824 = vmatpush.msra.mxu0 %v163
    %825 = vmatpush.msra.mxu0 %v160
    %826 = vmatpush.msra.mxu0 %v157
    %827 = vmatpush.msra.mxu0 %v154
    %828 = vmatpush.msra.mxu0 %v151
    %829 = vmatpush.msra.mxu0 %v148
    %830 = vmatpush.msra.mxu0 %v145
    %831 = vmatmul.f32.gmra.mxu0 %v793
    %v832 = vpop.f32.mrf.mxu0
    %v833 = vadd.f32 0.0, %v832
    %834 = vdwg.mxu0
    %835 = vmatpush.msra.mxu0 %v191
    %836 = vmatpush.msra.mxu0 %v188
    %837 = vmatpush.msra.mxu0 %v185
    %838 = vmatpush.msra.mxu0 %v182
    %839 = vmatpush.msra.mxu0 %v179
    %840 = vmatpush.msra.mxu0 %v176
    %841 = vmatpush.msra.mxu0 %v173
    %842 = vmatpush.msra.mxu0 %v170
    %843 = vmatpush.msra.mxu0 %v167
    %844 = vmatpush.msra.mxu0 %v164
    %845 = vmatpush.msra.mxu0 %v161
    %846 = vmatpush.msra.mxu0 %v158
    %847 = vmatpush.msra.mxu0 %v155
    %848 = vmatpush.msra.mxu0 %v152
    %849 = vmatpush.msra.mxu0 %v149
    %850 = vmatpush.msra.mxu0 %v146
    %851 = vmatmul.f32.gmra.mxu0 %v793
    %v852 = vpop.f32.mrf.mxu0
    %v853 = vadd.f32 0.0, %v852
    %854 = vdwg.mxu0
    %v857 = vrot.slane %v813, 3
    %v858 = vrot.slane %v833, 3
    %v861 = vadd.f32 %v93, %v857
    %v862 = vadd.f32 %v116, %v858
    %v863 = vxor.u32 %v861, 2147483648
    %v864 = vxor.u32 %v862, 2147483648
    %v865 = vmul.f32 %v863, 1.442695
    %v866 = vpow.pop %v865
    %v867 = vmul.f32 %v864, 1.442695
    %v868 = vpow.pop %v867
    %v869 = vadd.f32 %v866, 1.0
    %v870 = vadd.f32 %v868, 1.0
    %v871 = vrcp.pop %v869
    %v872 = vmul.f32 %v869, %v871
    %v873 = vsub.f32 1.0, %v872
    %v874 = vmul.f32 %v871, %v873
    %v875 = vadd.f32 %v871, %v874
    %vm876 = vweird.f32 %v869
    %vm877 = vweird.f32 %v871
    %vm878 = vmor %vm876, %vm877
    %v879 = vsel %vm878, %v871, %v875
    %v880 = vand.u32 2147483647, %v869
    %vm881 = vcmp.eq.f32.partialorder %v880, 8.507059e+37
    %v882 = vand.u32 %v869, 2147483648
    %v883 = vor.u32 1.1754944e-38, %v882
    %v884 = vsel %vm881, %v883, %v879
    %v885 = vmul.f32 1.0, %v884
    %v886 = vrcp.pop %v870
    %v887 = vmul.f32 %v870, %v886
    %v888 = vsub.f32 1.0, %v887
    %v889 = vmul.f32 %v886, %v888
    %v890 = vadd.f32 %v886, %v889
    %vm891 = vweird.f32 %v870
    %vm892 = vweird.f32 %v886
    %vm893 = vmor %vm891, %vm892
    %v894 = vsel %vm893, %v886, %v890
    %v895 = vand.u32 2147483647, %v870
    %vm896 = vcmp.eq.f32.partialorder %v895, 8.507059e+37
    %v897 = vand.u32 %v870, 2147483648
    %v898 = vor.u32 1.1754944e-38, %v897
    %v899 = vsel %vm896, %v898, %v894
    %v900 = vmul.f32 1.0, %v899
    %v901 = vadd.f32 %v853, %v192
    %v903 = vrot.slane %v901, 3
    %v905 = vmul.f32 %v885, %v903
    %v906 = vadd.f32 %v139, %v905
    %v907 = vtanh.pop %v906
    %v908 = vsub.f32 1.0, %v900
    %v909 = vmul.f32 %v908, %v907
    %v910 = vrot.slane %v790, 7
    %v912 = vmul.f32 %v900, %v910
    %v913 = vadd.f32 %v909, %v912
    %914 = vst [vmem:[%s5] sm:$0x20] %v913
    %v916 = vrot.slane %v913, 5
    %918 = vmatpush.msra.mxu0 %v189
    %919 = vmatpush.msra.mxu0 %v186
    %920 = vmatpush.msra.mxu0 %v183
    %921 = vmatpush.msra.mxu0 %v180
    %922 = vmatpush.msra.mxu0 %v177
    %923 = vmatpush.msra.mxu0 %v174
    %924 = vmatpush.msra.mxu0 %v171
    %925 = vmatpush.msra.mxu0 %v168
    %926 = vmatpush.msra.mxu0 %v165
    %927 = vmatpush.msra.mxu0 %v162
    %928 = vmatpush.msra.mxu0 %v159
    %929 = vmatpush.msra.mxu0 %v156
    %930 = vmatpush.msra.mxu0 %v153
    %931 = vmatpush.msra.mxu0 %v150
    %932 = vmatpush.msra.mxu0 %v147
    %933 = vmatpush.msra.mxu0 %v144
    %934 = vmatmul.f32.gmra.mxu0 %v916
    %v935 = vpop.f32.mrf.mxu0
    %v936 = vadd.f32 0.0, %v935
    %937 = vdwg.mxu0
    %938 = vmatpush.msra.mxu0 %v190
    %939 = vmatpush.msra.mxu0 %v187
    %940 = vmatpush.msra.mxu0 %v184
    %941 = vmatpush.msra.mxu0 %v181
    %942 = vmatpush.msra.mxu0 %v178
    %943 = vmatpush.msra.mxu0 %v175
    %944 = vmatpush.msra.mxu0 %v172
    %945 = vmatpush.msra.mxu0 %v169
    %946 = vmatpush.msra.mxu0 %v166
    %947 = vmatpush.msra.mxu0 %v163
    %948 = vmatpush.msra.mxu0 %v160
    %949 = vmatpush.msra.mxu0 %v157
    %950 = vmatpush.msra.mxu0 %v154
    %951 = vmatpush.msra.mxu0 %v151
    %952 = vmatpush.msra.mxu0 %v148
    %953 = vmatpush.msra.mxu0 %v145
    %954 = vmatmul.f32.gmra.mxu0 %v916
    %v955 = vpop.f32.mrf.mxu0
    %v956 = vadd.f32 0.0, %v955
    %957 = vdwg.mxu0
    %958 = vmatpush.msra.mxu0 %v191
    %959 = vmatpush.msra.mxu0 %v188
    %960 = vmatpush.msra.mxu0 %v185
    %961 = vmatpush.msra.mxu0 %v182
    %962 = vmatpush.msra.mxu0 %v179
    %963 = vmatpush.msra.mxu0 %v176
    %964 = vmatpush.msra.mxu0 %v173
    %965 = vmatpush.msra.mxu0 %v170
    %966 = vmatpush.msra.mxu0 %v167
    %967 = vmatpush.msra.mxu0 %v164
    %968 = vmatpush.msra.mxu0 %v161
    %969 = vmatpush.msra.mxu0 %v158
    %970 = vmatpush.msra.mxu0 %v155
    %971 = vmatpush.msra.mxu0 %v152
    %972 = vmatpush.msra.mxu0 %v149
    %973 = vmatpush.msra.mxu0 %v146
    %974 = vmatmul.f32.gmra.mxu0 %v916
    %v975 = vpop.f32.mrf.mxu0
    %v976 = vadd.f32 0.0, %v975
    %977 = vdwg.mxu0
    %v980 = vrot.slane %v936, 2
    %v981 = vrot.slane %v956, 2
    %v984 = vadd.f32 %v93, %v980
    %v985 = vadd.f32 %v116, %v981
    %v986 = vxor.u32 %v984, 2147483648
    %v987 = vxor.u32 %v985, 2147483648
    %v988 = vmul.f32 %v986, 1.442695
    %v989 = vpow.pop %v988
    %v990 = vmul.f32 %v987, 1.442695
    %v991 = vpow.pop %v990
    %v992 = vadd.f32 %v989, 1.0
    %v993 = vadd.f32 %v991, 1.0
    %v994 = vrcp.pop %v992
    %v995 = vmul.f32 %v992, %v994
    %v996 = vsub.f32 1.0, %v995
    %v997 = vmul.f32 %v994, %v996
    %v998 = vadd.f32 %v994, %v997
    %vm999 = vweird.f32 %v992
    %vm1000 = vweird.f32 %v994
    %vm1001 = vmor %vm999, %vm1000
    %v1002 = vsel %vm1001, %v994, %v998
    %v1003 = vand.u32 2147483647, %v992
    %vm1004 = vcmp.eq.f32.partialorder %v1003, 8.507059e+37
    %v1005 = vand.u32 %v992, 2147483648
    %v1006 = vor.u32 1.1754944e-38, %v1005
    %v1007 = vsel %vm1004, %v1006, %v1002
    %v1008 = vmul.f32 1.0, %v1007
    %v1009 = vrcp.pop %v993
    %v1010 = vmul.f32 %v993, %v1009
    %v1011 = vsub.f32 1.0, %v1010
    %v1012 = vmul.f32 %v1009, %v1011
    %v1013 = vadd.f32 %v1009, %v1012
    %vm1014 = vweird.f32 %v993
    %vm1015 = vweird.f32 %v1009
    %vm1016 = vmor %vm1014, %vm1015
    %v1017 = vsel %vm1016, %v1009, %v1013
    %v1018 = vand.u32 2147483647, %v993
    %vm1019 = vcmp.eq.f32.partialorder %v1018, 8.507059e+37
    %v1020 = vand.u32 %v993, 2147483648
    %v1021 = vor.u32 1.1754944e-38, %v1020
    %v1022 = vsel %vm1019, %v1021, %v1017
    %v1023 = vmul.f32 1.0, %v1022
    %v1024 = vadd.f32 %v976, %v192
    %v1026 = vrot.slane %v1024, 2
    %v1028 = vmul.f32 %v1008, %v1026
    %v1029 = vadd.f32 %v139, %v1028
    %v1030 = vtanh.pop %v1029
    %v1031 = vsub.f32 1.0, %v1023
    %v1032 = vmul.f32 %v1031, %v1030
    %v1033 = vrot.slane %v913, 7
    %v1035 = vmul.f32 %v1023, %v1033
    %v1036 = vadd.f32 %v1032, %v1035
    %1037 = vst [vmem:[%s5] sm:$0x40] %v1036
    %v1039 = vrot.slane %v1036, 6
    %1041 = vmatpush.msra.mxu0 %v189
    %1042 = vmatpush.msra.mxu0 %v186
    %1043 = vmatpush.msra.mxu0 %v183
    %1044 = vmatpush.msra.mxu0 %v180
    %1045 = vmatpush.msra.mxu0 %v177
    %1046 = vmatpush.msra.mxu0 %v174
    %1047 = vmatpush.msra.mxu0 %v171
    %1048 = vmatpush.msra.mxu0 %v168
    %1049 = vmatpush.msra.mxu0 %v165
    %1050 = vmatpush.msra.mxu0 %v162
    %1051 = vmatpush.msra.mxu0 %v159
    %1052 = vmatpush.msra.mxu0 %v156
    %1053 = vmatpush.msra.mxu0 %v153
    %1054 = vmatpush.msra.mxu0 %v150
    %1055 = vmatpush.msra.mxu0 %v147
    %1056 = vmatpush.msra.mxu0 %v144
    %1057 = vmatmul.f32.gmra.mxu0 %v1039
    %v1058 = vpop.f32.mrf.mxu0
    %v1059 = vadd.f32 0.0, %v1058
    %1060 = vdwg.mxu0
    %1061 = vmatpush.msra.mxu0 %v190
    %1062 = vmatpush.msra.mxu0 %v187
    %1063 = vmatpush.msra.mxu0 %v184
    %1064 = vmatpush.msra.mxu0 %v181
    %1065 = vmatpush.msra.mxu0 %v178
    %1066 = vmatpush.msra.mxu0 %v175
    %1067 = vmatpush.msra.mxu0 %v172
    %1068 = vmatpush.msra.mxu0 %v169
    %1069 = vmatpush.msra.mxu0 %v166
    %1070 = vmatpush.msra.mxu0 %v163
    %1071 = vmatpush.msra.mxu0 %v160
    %1072 = vmatpush.msra.mxu0 %v157
    %1073 = vmatpush.msra.mxu0 %v154
    %1074 = vmatpush.msra.mxu0 %v151
    %1075 = vmatpush.msra.mxu0 %v148
    %1076 = vmatpush.msra.mxu0 %v145
    %1077 = vmatmul.f32.gmra.mxu0 %v1039
    %v1078 = vpop.f32.mrf.mxu0
    %v1079 = vadd.f32 0.0, %v1078
    %1080 = vdwg.mxu0
    %1081 = vmatpush.msra.mxu0 %v191
    %1082 = vmatpush.msra.mxu0 %v188
    %1083 = vmatpush.msra.mxu0 %v185
    %1084 = vmatpush.msra.mxu0 %v182
    %1085 = vmatpush.msra.mxu0 %v179
    %1086 = vmatpush.msra.mxu0 %v176
    %1087 = vmatpush.msra.mxu0 %v173
    %1088 = vmatpush.msra.mxu0 %v170
    %1089 = vmatpush.msra.mxu0 %v167
    %1090 = vmatpush.msra.mxu0 %v164
    %1091 = vmatpush.msra.mxu0 %v161
    %1092 = vmatpush.msra.mxu0 %v158
    %1093 = vmatpush.msra.mxu0 %v155
    %1094 = vmatpush.msra.mxu0 %v152
    %1095 = vmatpush.msra.mxu0 %v149
    %1096 = vmatpush.msra.mxu0 %v146
    %1097 = vmatmul.f32.gmra.mxu0 %v1039
    %v1098 = vpop.f32.mrf.mxu0
    %v1099 = vadd.f32 0.0, %v1098
    %1100 = vdwg.mxu0
    %v1103 = vrot.slane %v1059, 1
    %v1104 = vrot.slane %v1079, 1
    %v1107 = vadd.f32 %v93, %v1103
    %v1108 = vadd.f32 %v116, %v1104
    %v1109 = vxor.u32 %v1107, 2147483648
    %v1110 = vxor.u32 %v1108, 2147483648
    %v1111 = vmul.f32 %v1109, 1.442695
    %v1112 = vpow.pop %v1111
    %v1113 = vmul.f32 %v1110, 1.442695
    %v1114 = vpow.pop %v1113
    %v1115 = vadd.f32 %v1112, 1.0
    %v1116 = vadd.f32 %v1114, 1.0
    %v1117 = vrcp.pop %v1115
    %v1118 = vmul.f32 %v1115, %v1117
    %v1119 = vsub.f32 1.0, %v1118
    %v1120 = vmul.f32 %v1117, %v1119
    %v1121 = vadd.f32 %v1117, %v1120
    %vm1122 = vweird.f32 %v1115
    %vm1123 = vweird.f32 %v1117
    %vm1124 = vmor %vm1122, %vm1123
    %v1125 = vsel %vm1124, %v1117, %v1121
    %v1126 = vand.u32 2147483647, %v1115
    %vm1127 = vcmp.eq.f32.partialorder %v1126, 8.507059e+37
    %v1128 = vand.u32 %v1115, 2147483648
    %v1129 = vor.u32 1.1754944e-38, %v1128
    %v1130 = vsel %vm1127, %v1129, %v1125
    %v1131 = vmul.f32 1.0, %v1130
    %v1132 = vrcp.pop %v1116
    %v1133 = vmul.f32 %v1116, %v1132
    %v1134 = vsub.f32 1.0, %v1133
    %v1135 = vmul.f32 %v1132, %v1134
    %v1136 = vadd.f32 %v1132, %v1135
    %vm1137 = vweird.f32 %v1116
    %vm1138 = vweird.f32 %v1132
    %vm1139 = vmor %vm1137, %vm1138
    %v1140 = vsel %vm1139, %v1132, %v1136
    %v1141 = vand.u32 2147483647, %v1116
    %vm1142 = vcmp.eq.f32.partialorder %v1141, 8.507059e+37
    %v1143 = vand.u32 %v1116, 2147483648
    %v1144 = vor.u32 1.1754944e-38, %v1143
    %v1145 = vsel %vm1142, %v1144, %v1140
    %v1146 = vmul.f32 1.0, %v1145
    %v1147 = vadd.f32 %v1099, %v192
    %v1149 = vrot.slane %v1147, 1
    %v1151 = vmul.f32 %v1131, %v1149
    %v1152 = vadd.f32 %v139, %v1151
    %v1153 = vtanh.pop %v1152
    %v1154 = vsub.f32 1.0, %v1146
    %v1155 = vmul.f32 %v1154, %v1153
    %v1156 = vrot.slane %v1036, 7
    %v1158 = vmul.f32 %v1146, %v1156
    %v1159 = vadd.f32 %v1155, %v1158
    %1160 = vst [vmem:[%s5] sm:$0x80] %v1159
    %v1162 = vrot.slane %v1159, 7
    %1164 = vmatpush.msra.mxu0 %v189
    %1165 = vmatpush.msra.mxu0 %v186
    %1166 = vmatpush.msra.mxu0 %v183
    %1167 = vmatpush.msra.mxu0 %v180
    %1168 = vmatpush.msra.mxu0 %v177
    %1169 = vmatpush.msra.mxu0 %v174
    %1170 = vmatpush.msra.mxu0 %v171
    %1171 = vmatpush.msra.mxu0 %v168
    %1172 = vmatpush.msra.mxu0 %v165
    %1173 = vmatpush.msra.mxu0 %v162
    %1174 = vmatpush.msra.mxu0 %v159
    %1175 = vmatpush.msra.mxu0 %v156
    %1176 = vmatpush.msra.mxu0 %v153
    %1177 = vmatpush.msra.mxu0 %v150
    %1178 = vmatpush.msra.mxu0 %v147
    %1179 = vmatpush.msra.mxu0 %v144
    %1180 = vmatmul.f32.gmra.mxu0 %v1162
    %v1181 = vpop.f32.mrf.mxu0
    %v1182 = vadd.f32 0.0, %v1181
    %1183 = vdwg.mxu0
    %1184 = vmatpush.msra.mxu0 %v190
    %1185 = vmatpush.msra.mxu0 %v187
    %1186 = vmatpush.msra.mxu0 %v184
    %1187 = vmatpush.msra.mxu0 %v181
    %1188 = vmatpush.msra.mxu0 %v178
    %1189 = vmatpush.msra.mxu0 %v175
    %1190 = vmatpush.msra.mxu0 %v172
    %1191 = vmatpush.msra.mxu0 %v169
    %1192 = vmatpush.msra.mxu0 %v166
    %1193 = vmatpush.msra.mxu0 %v163
    %1194 = vmatpush.msra.mxu0 %v160
    %1195 = vmatpush.msra.mxu0 %v157
    %1196 = vmatpush.msra.mxu0 %v154
    %1197 = vmatpush.msra.mxu0 %v151
    %1198 = vmatpush.msra.mxu0 %v148
    %1199 = vmatpush.msra.mxu0 %v145
    %1200 = vmatmul.f32.gmra.mxu0 %v1162
    %v1201 = vpop.f32.mrf.mxu0
    %v1202 = vadd.f32 0.0, %v1201
    %1203 = vdwg.mxu0
    %1204 = vmatpush.msra.mxu0 %v191
    %1205 = vmatpush.msra.mxu0 %v188
    %1206 = vmatpush.msra.mxu0 %v185
    %1207 = vmatpush.msra.mxu0 %v182
    %1208 = vmatpush.msra.mxu0 %v179
    %1209 = vmatpush.msra.mxu0 %v176
    %1210 = vmatpush.msra.mxu0 %v173
    %1211 = vmatpush.msra.mxu0 %v170
    %1212 = vmatpush.msra.mxu0 %v167
    %1213 = vmatpush.msra.mxu0 %v164
    %1214 = vmatpush.msra.mxu0 %v161
    %1215 = vmatpush.msra.mxu0 %v158
    %1216 = vmatpush.msra.mxu0 %v155
    %1217 = vmatpush.msra.mxu0 %v152
    %1218 = vmatpush.msra.mxu0 %v149
    %1219 = vmatpush.msra.mxu0 %v146
    %1220 = vmatmul.f32.gmra.mxu0 %v1162
    %v1221 = vpop.f32.mrf.mxu0
    %v1222 = vadd.f32 0.0, %v1221
    %1223 = vdwg.mxu0
    %v1224 = vadd.f32 %v96, %v1182
    %v1225 = vadd.f32 %v119, %v1202
    %v1226 = vxor.u32 %v1224, 2147483648
    %v1227 = vxor.u32 %v1225, 2147483648
    %v1228 = vmul.f32 %v1226, 1.442695
    %v1229 = vpow.pop %v1228
    %v1230 = vmul.f32 %v1227, 1.442695
    %v1231 = vpow.pop %v1230
    %v1232 = vadd.f32 %v1229, 1.0
    %v1233 = vadd.f32 %v1231, 1.0
    %v1234 = vrcp.pop %v1232
    %v1235 = vmul.f32 %v1232, %v1234
    %v1236 = vsub.f32 1.0, %v1235
    %v1237 = vmul.f32 %v1234, %v1236
    %v1238 = vadd.f32 %v1234, %v1237
    %vm1239 = vweird.f32 %v1232
    %vm1240 = vweird.f32 %v1234
    %vm1241 = vmor %vm1239, %vm1240
    %v1242 = vsel %vm1241, %v1234, %v1238
    %v1243 = vand.u32 2147483647, %v1232
    %vm1244 = vcmp.eq.f32.partialorder %v1243, 8.507059e+37
    %v1245 = vand.u32 %v1232, 2147483648
    %v1246 = vor.u32 1.1754944e-38, %v1245
    %v1247 = vsel %vm1244, %v1246, %v1242
    %v1248 = vmul.f32 1.0, %v1247
    %v1249 = vrcp.pop %v1233
    %v1250 = vmul.f32 %v1233, %v1249
    %v1251 = vsub.f32 1.0, %v1250
    %v1252 = vmul.f32 %v1249, %v1251
    %v1253 = vadd.f32 %v1249, %v1252
    %vm1254 = vweird.f32 %v1233
    %vm1255 = vweird.f32 %v1249
    %vm1256 = vmor %vm1254, %vm1255
    %v1257 = vsel %vm1256, %v1249, %v1253
    %v1258 = vand.u32 2147483647, %v1233
    %vm1259 = vcmp.eq.f32.partialorder %v1258, 8.507059e+37
    %v1260 = vand.u32 %v1233, 2147483648
    %v1261 = vor.u32 1.1754944e-38, %v1260
    %v1262 = vsel %vm1259, %v1261, %v1257
    %v1263 = vmul.f32 1.0, %v1262
    %v1264 = vadd.f32 %v1222, %v192
    %v1265 = vmul.f32 %v1248, %v1264
    %v1266 = vadd.f32 %v142, %v1265
    %v1267 = vtanh.pop %v1266
    %v1268 = vsub.f32 1.0, %v1263
    %v1269 = vmul.f32 %v1268, %v1267
    %v1270 = vmul.f32 %v1263, %v1162
    %v1271 = vadd.f32 %v1269, %v1270
    %1272 = vst [vmem:[%s5 + $0x8] sm:$0x1] %v1271
    %1273 = vmatpush.msra.mxu0 %v189
    %1274 = vmatpush.msra.mxu0 %v186
    %1275 = vmatpush.msra.mxu0 %v183
    %1276 = vmatpush.msra.mxu0 %v180
    %1277 = vmatpush.msra.mxu0 %v177
    %1278 = vmatpush.msra.mxu0 %v174
    %1279 = vmatpush.msra.mxu0 %v171
    %1280 = vmatpush.msra.mxu0 %v168
    %1281 = vmatpush.msra.mxu0 %v165
    %1282 = vmatpush.msra.mxu0 %v162
    %1283 = vmatpush.msra.mxu0 %v159
    %1284 = vmatpush.msra.mxu0 %v156
    %1285 = vmatpush.msra.mxu0 %v153
    %1286 = vmatpush.msra.mxu0 %v150
    %1287 = vmatpush.msra.mxu0 %v147
    %1288 = vmatpush.msra.mxu0 %v144
    %1289 = vmatmul.f32.gmra.mxu0 %v1271
    %v1290 = vpop.f32.mrf.mxu0
    %v1291 = vadd.f32 0.0, %v1290
    %1292 = vdwg.mxu0
    %1293 = vmatpush.msra.mxu0 %v190
    %1294 = vmatpush.msra.mxu0 %v187
    %1295 = vmatpush.msra.mxu0 %v184
    %1296 = vmatpush.msra.mxu0 %v181
    %1297 = vmatpush.msra.mxu0 %v178
    %1298 = vmatpush.msra.mxu0 %v175
    %1299 = vmatpush.msra.mxu0 %v172
    %1300 = vmatpush.msra.mxu0 %v169
    %1301 = vmatpush.msra.mxu0 %v166
    %1302 = vmatpush.msra.mxu0 %v163
    %1303 = vmatpush.msra.mxu0 %v160
    %1304 = vmatpush.msra.mxu0 %v157
    %1305 = vmatpush.msra.mxu0 %v154
    %1306 = vmatpush.msra.mxu0 %v151
    %1307 = vmatpush.msra.mxu0 %v148
    %1308 = vmatpush.msra.mxu0 %v145
    %1309 = vmatmul.f32.gmra.mxu0 %v1271
    %v1310 = vpop.f32.mrf.mxu0
    %v1311 = vadd.f32 0.0, %v1310
    %1312 = vdwg.mxu0
    %1313 = vmatpush.msra.mxu0 %v191
    %1314 = vmatpush.msra.mxu0 %v188
    %1315 = vmatpush.msra.mxu0 %v185
    %1316 = vmatpush.msra.mxu0 %v182
    %1317 = vmatpush.msra.mxu0 %v179
    %1318 = vmatpush.msra.mxu0 %v176
    %1319 = vmatpush.msra.mxu0 %v173
    %1320 = vmatpush.msra.mxu0 %v170
    %1321 = vmatpush.msra.mxu0 %v167
    %1322 = vmatpush.msra.mxu0 %v164
    %1323 = vmatpush.msra.mxu0 %v161
    %1324 = vmatpush.msra.mxu0 %v158
    %1325 = vmatpush.msra.mxu0 %v155
    %1326 = vmatpush.msra.mxu0 %v152
    %1327 = vmatpush.msra.mxu0 %v149
    %1328 = vmatpush.msra.mxu0 %v146
    %1329 = vmatmul.f32.gmra.mxu0 %v1271
    %v1330 = vpop.f32.mrf.mxu0
    %v1331 = vadd.f32 0.0, %v1330
    %1332 = vdwg.mxu0
    %v1335 = vrot.slane %v1291, 7
    %v1336 = vrot.slane %v1311, 7
    %v1339 = vadd.f32 %v96, %v1335
    %v1340 = vadd.f32 %v119, %v1336
    %v1341 = vxor.u32 %v1339, 2147483648
    %v1342 = vxor.u32 %v1340, 2147483648
    %v1343 = vmul.f32 %v1341, 1.442695
    %v1344 = vpow.pop %v1343
    %v1345 = vmul.f32 %v1342, 1.442695
    %v1346 = vpow.pop %v1345
    %v1347 = vadd.f32 %v1344, 1.0
    %v1348 = vadd.f32 %v1346, 1.0
    %v1349 = vrcp.pop %v1347
    %v1350 = vmul.f32 %v1347, %v1349
    %v1351 = vsub.f32 1.0, %v1350
    %v1352 = vmul.f32 %v1349, %v1351
    %v1353 = vadd.f32 %v1349, %v1352
    %vm1354 = vweird.f32 %v1347
    %vm1355 = vweird.f32 %v1349
    %vm1356 = vmor %vm1354, %vm1355
    %v1357 = vsel %vm1356, %v1349, %v1353
    %v1358 = vand.u32 2147483647, %v1347
    %vm1359 = vcmp.eq.f32.partialorder %v1358, 8.507059e+37
    %v1360 = vand.u32 %v1347, 2147483648
    %v1361 = vor.u32 1.1754944e-38, %v1360
    %v1362 = vsel %vm1359, %v1361, %v1357
    %v1363 = vmul.f32 1.0, %v1362
    %v1364 = vrcp.pop %v1348
    %v1365 = vmul.f32 %v1348, %v1364
    %v1366 = vsub.f32 1.0, %v1365
    %v1367 = vmul.f32 %v1364, %v1366
    %v1368 = vadd.f32 %v1364, %v1367
    %vm1369 = vweird.f32 %v1348
    %vm1370 = vweird.f32 %v1364
    %vm1371 = vmor %vm1369, %vm1370
    %v1372 = vsel %vm1371, %v1364, %v1368
    %v1373 = vand.u32 2147483647, %v1348
    %vm1374 = vcmp.eq.f32.partialorder %v1373, 8.507059e+37
    %v1375 = vand.u32 %v1348, 2147483648
    %v1376 = vor.u32 1.1754944e-38, %v1375
    %v1377 = vsel %vm1374, %v1376, %v1372
    %v1378 = vmul.f32 1.0, %v1377
    %v1379 = vadd.f32 %v1331, %v192
    %v1381 = vrot.slane %v1379, 7
    %v1383 = vmul.f32 %v1363, %v1381
    %v1384 = vadd.f32 %v142, %v1383
    %v1385 = vtanh.pop %v1384
    %v1386 = vsub.f32 1.0, %v1378
    %v1387 = vmul.f32 %v1386, %v1385
    %v1389 = vrot.slane %v1271, 7
    %v1391 = vmul.f32 %v1378, %v1389
    %v1392 = vadd.f32 %v1387, %v1391
    %1393 = vst [vmem:[%s5 + $0x8] sm:$0x2] %v1392
    // Predicated region
    $region30: #{gru_forward.1} parent=1 // pred_check
      _
    $region31: #{gru_forward.1} parent=1 // pred_check_branch
      %1395 = sbr.rel (0) target = $region33
    $region32: #{gru_forward.1} parent=1 // pred_region
      _
    $region33: #{gru_forward.1} parent=1 // pred_fallthru
      _
    // Predicated region
    $region34: #{gru_forward.1} parent=1 // pred_check
      _
    $region35: #{gru_forward.1} parent=1 // pred_check_branch
      %1397 = sbr.rel (0) target = $region37
    $region36: #{gru_forward.1} parent=1 // pred_region
      _
    $region37: #{gru_forward.1} parent=1 // pred_fallthru
      _
    %1398 = vsyncpa [#allocation3], 1
    %1399 = vsyncpa [#allocation5], 1

</llo_original>
